<compile_context>
chip_gen: v6e
topology: v6e:2x2x1
jax: 0.10.0
libtpu: 0.0.40
codegen_flags: <defaults>
</compile_context>

<pallas_src>
import functools
import math

import jax
import jax.numpy as jnp
from jax.experimental import pallas as pl
from jax.experimental.pallas import tpu as pltpu

EPS = 1e-5
NEG_SLOPE = 0.2


def _leaky_relu(x):
    return jnp.where(x >= 0, x, NEG_SLOPE * x)


def _round_up(n, m):
    return ((n + m - 1) // m) * m


def _vmem_capacity_bytes():
    """Generation-aware VMEM size (128 MiB v5e/v6e, 64 MiB v7x), with a
    conservative fallback when the query is unavailable (CPU / interpret)."""
    try:
        info = pltpu.get_tpu_info()
        cap = int(getattr(info, "vmem_capacity_bytes", 0))
        if cap > 0:
            return cap
    except Exception:
        pass
    return 64 << 20


# --------------------------------------------------------------------------
# Pass 1: per-feature sum and sum-of-squares of x (full-batch BN1 statistics).
# --------------------------------------------------------------------------
def _stats_kernel(x_ref, sum_ref, sq_ref, *, n_valid, block_rows, mask_last):
    i = pl.program_id(0)

    @pl.when(i == 0)
    def _():
        sum_ref[...] = jnp.zeros_like(sum_ref)
        sq_ref[...] = jnp.zeros_like(sq_ref)

    x = x_ref[...].astype(jnp.float32)

    def _accum(xv):
        sum_ref[...] += jnp.sum(xv, axis=0, keepdims=True)
        sq_ref[...] += jnp.sum(xv * xv, axis=0, keepdims=True)

    if mask_last:
        # Only the ragged last tile has rows past the true batch; they contain
        # unspecified data and must be zeroed out of the reduction.
        last = pl.num_programs(0) - 1

        @pl.when(i != last)
        def _():
            _accum(x)

        @pl.when(i == last)
        def _():
            row = jax.lax.broadcasted_iota(jnp.int32, x.shape, 0)
            _accum(jnp.where(row < (n_valid - i * block_rows), x, 0.0))
    else:
        _accum(x)


# --------------------------------------------------------------------------
# Pass 2: BN1 -> LeakyReLU -> Linear1, plus BN2 statistics accumulation.
# (Dropout p=0.0 is the identity and elided.)
# --------------------------------------------------------------------------
def _bn_act_linear_stats_kernel(x_ref, scale_ref, shift_ref, w_ref, wb_ref,
                                h_ref, s2_ref, q2_ref,
                                *, n_valid, block_rows, mask_last):
    i = pl.program_id(0)

    @pl.when(i == 0)
    def _():
        s2_ref[...] = jnp.zeros_like(s2_ref)
        q2_ref[...] = jnp.zeros_like(q2_ref)

    x = x_ref[...].astype(jnp.float32)
    a = _leaky_relu(x * scale_ref[...] + shift_ref[...])      # BN1 + LeakyReLU
    h = jnp.dot(a.astype(jnp.bfloat16), w_ref[...],
                preferred_element_type=jnp.float32) + wb_ref[...]
    h_ref[...] = h.astype(h_ref.dtype)                        # bf16 HBM round-trip

    def _accum(hm):
        s2_ref[...] += jnp.sum(hm, axis=0, keepdims=True)
        q2_ref[...] += jnp.sum(hm * hm, axis=0, keepdims=True)

    if mask_last:
        last = pl.num_programs(0) - 1

        @pl.when(i != last)
        def _():
            _accum(h)

        @pl.when(i == last)
        def _():
            row = jax.lax.broadcasted_iota(jnp.int32, h.shape, 0)
            _accum(jnp.where(row < (n_valid - i * block_rows), h, 0.0))
    else:
        _accum(h)


# --------------------------------------------------------------------------
# Pass 3: BN2 -> LeakyReLU -> Linear2.
# --------------------------------------------------------------------------
def _bn_act_linear_kernel(h_ref, scale_ref, shift_ref, w_ref, wb_ref, o_ref):
    a = _leaky_relu(h_ref[...].astype(jnp.float32) * scale_ref[...]
                    + shift_ref[...])
    out = jnp.dot(a.astype(jnp.bfloat16), w_ref[...],
                  preferred_element_type=jnp.float32) + wb_ref[...]
    o_ref[...] = out.astype(o_ref.dtype)


# --------------------------------------------------------------------------
# Wrapper
# --------------------------------------------------------------------------
@functools.partial(jax.jit, static_argnames=("block_rows",))
def mlp_forward(x, g1, b1, w1, bias1, g2, b2, w2, bias2, *, block_rows=512):
    """gearnet MLP forward.

    x: (N, C_in); g*/b*: (C,) BatchNorm gamma/beta; w1: (C_in, C_mid),
    w2: (C_mid, C_out) (pre-transposed vs PyTorch (out,in)); bias1: (C_mid,),
    bias2: (C_out,).  block_rows: batch tile (multiple of 8), auto-capped to
    the chip's VMEM budget.
    """
    assert block_rows % 8 == 0
    n, c_in = x.shape
    c_mid = w1.shape[1]
    c_out = w2.shape[1]
    f32 = jnp.float32

    # ---- batch-tile selection (generation aware) ---------------------------
    vmem_cap = _vmem_capacity_bytes()
    budget = int(0.35 * vmem_cap)          # leave room for compiler scratch

    def _working_set(br_):
        # largest per-pass working set: double-buffered activation tiles plus
        # the resident bf16 weight matrix.
        ws2 = 2 * br_ * c_in * 4 + 2 * br_ * c_mid * 2 + c_in * c_mid * 2
        ws3 = 2 * br_ * c_mid * 2 + 2 * br_ * c_out * 4 + c_mid * c_out * 2
        return max(ws2, ws3)

    br = min(block_rows, _round_up(n, 8))
    while br > 64 and _working_set(br) > budget:
        br = max(64, _round_up(br // 2, 8))

    num_tiles = pl.cdiv(n, br)
    mask_last = (n % br) != 0

    def vmem_limit(ws):
        return int(min(max(2 * ws, 4 << 20), int(0.75 * vmem_cap)))

    # ---- parameter staging (no padded copies; feature dims used as-is) -----
    g1v = g1.astype(f32).reshape(1, c_in)
    b1v = b1.astype(f32).reshape(1, c_in)
    g2v = g2.astype(f32).reshape(1, c_mid)
    b2v = b2.astype(f32).reshape(1, c_mid)
    wb1v = bias1.astype(f32).reshape(1, c_mid)
    wb2v = bias2.astype(f32).reshape(1, c_out)
    w1b = w1.astype(jnp.bfloat16)
    w2b = w2.astype(jnp.bfloat16)

    def row_spec(c):         # batch-tiled activations
        return pl.BlockSpec((br, c), lambda i: (i, 0))

    def vec_spec(c):         # per-feature vectors, resident across grid steps
        return pl.BlockSpec((1, c), lambda i: (0, 0))

    def mat_spec(r, c):      # weights, resident across grid steps
        return pl.BlockSpec((r, c), lambda i: (0, 0))

    x_bytes = x.dtype.itemsize

    # ---- pass 1: BN1 batch statistics ---------------------------------------
    s1, q1 = pl.pallas_call(
        functools.partial(_stats_kernel, n_valid=n, block_rows=br,
                          mask_last=mask_last),
        grid=(num_tiles,),
        in_specs=[row_spec(c_in)],
        out_specs=(vec_spec(c_in), vec_spec(c_in)),
        out_shape=(jax.ShapeDtypeStruct((1, c_in), f32),
                   jax.ShapeDtypeStruct((1, c_in), f32)),
        compiler_params=pltpu.CompilerParams(
            dimension_semantics=("arbitrary",),
            vmem_limit_bytes=vmem_limit(2 * br * c_in * x_bytes)),
        cost_estimate=pl.CostEstimate(flops=3 * n * c_in,
                                      transcendentals=0,
                                      bytes_accessed=n * c_in * x_bytes),
    )(x)

    # fold BN1 into a single scale/shift (tiny (1,C) XLA ops, done once)
    inv_n = 1.0 / n
    mean1 = s1 * inv_n
    var1 = jnp.maximum(q1 * inv_n - mean1 * mean1, 0.0)
    scale1 = g1v * jax.lax.rsqrt(var1 + EPS)
    shift1 = b1v - mean1 * scale1

    # ---- pass 2: BN1 + LeakyReLU + Linear1 (+ BN2 statistics) ---------------
    h1, s2, q2 = pl.pallas_call(
        functools.partial(_bn_act_linear_stats_kernel, n_valid=n,
                          block_rows=br, mask_last=mask_last),
        grid=(num_tiles,),
        in_specs=[row_spec(c_in),
                  vec_spec(c_in), vec_spec(c_in),
                  mat_spec(c_in, c_mid), vec_spec(c_mid)],
        out_specs=(row_spec(c_mid), vec_spec(c_mid), vec_spec(c_mid)),
        out_shape=(jax.ShapeDtypeStruct((n, c_mid), jnp.bfloat16),
                   jax.ShapeDtypeStruct((1, c_mid), f32),
                   jax.ShapeDtypeStruct((1, c_mid), f32)),
        compiler_params=pltpu.CompilerParams(
            dimension_semantics=("arbitrary",),
            vmem_limit_bytes=vmem_limit(
                2 * br * c_in * 4 + 2 * br * c_mid * 2 + c_in * c_mid * 2)),
        cost_estimate=pl.CostEstimate(
            flops=2 * n * c_in * c_mid + 10 * n * c_in,
            transcendentals=0,
            bytes_accessed=n * c_in * x_bytes + n * c_mid * 2 + c_in * c_mid * 2),
    )(x, scale1, shift1, w1b, wb1v)

    # fold BN2 (statistics computed from the pre-cast f32 hidden activation)
    mean2 = s2 * inv_n
    var2 = jnp.maximum(q2 * inv_n - mean2 * mean2, 0.0)
    scale2 = g2v * jax.lax.rsqrt(var2 + EPS)
    shift2 = b2v - mean2 * scale2

    # ---- pass 3: BN2 + LeakyReLU + Linear2 ----------------------------------
    out = pl.pallas_call(
        _bn_act_linear_kernel,
        grid=(num_tiles,),
        in_specs=[row_spec(c_mid),
                  vec_spec(c_mid), vec_spec(c_mid),
                  mat_spec(c_mid, c_out), vec_spec(c_out)],
        out_specs=row_spec(c_out),
        out_shape=jax.ShapeDtypeStruct((n, c_out), x.dtype),
        compiler_params=pltpu.CompilerParams(
            dimension_semantics=("parallel",),     # independent tiles -> megacore
            vmem_limit_bytes=vmem_limit(
                2 * br * c_mid * 2 + 2 * br * c_out * 4 + c_mid * c_out * 2)),
        cost_estimate=pl.CostEstimate(
            flops=2 * n * c_mid * c_out + 10 * n * c_mid,
            transcendentals=0,
            bytes_accessed=n * c_mid * 2 + n * c_out * 4 + c_mid * c_out * 2),
    )(h1, scale2, shift2, w2b, wb2v)

    return out


# --------------------------------------------------------------------------
# Pure-JAX reference (training-mode BN, biased variance).
# --------------------------------------------------------------------------
def mlp_reference(x, g1, b1, w1, bias1, g2, b2, w2, bias2,
                  matmul_dtype=jnp.float32):
    def bn(v, g, b):
        mean = jnp.mean(v, axis=0, keepdims=True)
        var = jnp.mean((v - mean) ** 2, axis=0, keepdims=True)
        return (v - mean) * jax.lax.rsqrt(var + EPS) * g + b

    h = _leaky_relu(bn(x.astype(jnp.float32), g1, b1))
    h = jnp.dot(h.astype(matmul_dtype), w1.astype(matmul_dtype),
                preferred_element_type=jnp.float32) + bias1
    h = _leaky_relu(bn(h, g2, b2))
    return jnp.dot(h.astype(matmul_dtype), w2.astype(matmul_dtype),
                   preferred_element_type=jnp.float32) + bias2


if __name__ == "__main__":
    # N=200 with block_rows=128 exercises multi-tile stats accumulation and
    # the ragged-last-tile masking path.
    N, C_IN, C_MID, C_OUT = 200, 32, 64, 16

    key = jax.random.PRNGKey(0)
    kx, kw1, kb1, kw2, kb2 = jax.random.split(key, 5)

    x = jax.random.normal(kx, (N, C_IN), dtype=jnp.float32)

    # BatchNorm params (PyTorch default init: gamma=1, beta=0).
    g1 = jnp.ones((C_IN,), jnp.float32)
    b1 = jnp.zeros((C_IN,), jnp.float32)
    g2 = jnp.ones((C_MID,), jnp.float32)
    b2 = jnp.zeros((C_MID,), jnp.float32)

    # Linear params, stored pre-transposed as (in, out).
    lim1 = 1.0 / math.sqrt(C_IN)
    w1 = jax.random.uniform(kw1, (C_IN, C_MID), jnp.float32, -lim1, lim1)
    bias1 = jax.random.uniform(kb1, (C_MID,), jnp.float32, -lim1, lim1)
    lim2 = 1.0 / math.sqrt(C_MID)
    w2 = jax.random.uniform(kw2, (C_MID, C_OUT), jnp.float32, -lim2, lim2)
    bias2 = jax.random.uniform(kb2, (C_OUT,), jnp.float32, -lim2, lim2)

    out = mlp_forward(x, g1, b1, w1, bias1, g2, b2, w2, bias2, block_rows=128)
    out = jax.block_until_ready(out)
    assert out.shape == (N, C_OUT)

    # Primary check: reference mirroring the kernel's bf16 MXU operands
    # (f32 accumulation) -- validates BN stats, tiling, masking, bf16 h1.
    ref_bf16 = mlp_reference(x, g1, b1, w1, bias1, g2, b2, w2, bias2,
                             matmul_dtype=jnp.bfloat16)
    assert jnp.allclose(out, ref_bf16, atol=2e-2, rtol=2e-2), \
        "mismatch vs bf16-matmul JAX reference"

    # Sanity check against the pure-f32 reference (loose tolerance: bf16
    # matmul operands and a bf16 hidden-activation round-trip).
    ref_f32 = mlp_reference(x, g1, b1, w1, bias1, g2, b2, w2, bias2,
                            matmul_dtype=jnp.float32)
    assert jnp.allclose(out, ref_f32, atol=1e-1, rtol=1e-1), \
        "mismatch vs f32 JAX reference"

    print("KERNEL_OK")
</pallas_src>

<mosaic_0001>
module attributes {stable_mosaic.version = 11 : i64} {
  func.func @_stats_kernel(%arg0: i32, %arg1: memref<128x32xf32, #tpu.memory_space<vmem>>, %arg2: memref<1x32xf32, #tpu.memory_space<vmem>>, %arg3: memref<1x32xf32, #tpu.memory_space<vmem>>) attributes {dimension_semantics = [#tpu.dimension_semantics<arbitrary>], iteration_bounds = array<i64: 2>, scalar_prefetch = 0 : i64, scratch_operands = 0 : i64, tpu.core_type = #tpu.core_type<tc>, window_params = [{transform_indices = @transform_0, window_bounds = array<i64: 128, 32>}, {pipeline_mode = #tpu.pipeline_mode<synchronous>, transform_indices = @transform_1, window_bounds = array<i64: 1, 32>}, {pipeline_mode = #tpu.pipeline_mode<synchronous>, transform_indices = @transform_2, window_bounds = array<i64: 1, 32>}]} {
    %c0_i32 = arith.constant 0 : i32
    %0 = arith.cmpi eq, %arg0, %c0_i32 : i32
    %1 = arith.extui %0 : i1 to i32
    %c0_i32_0 = arith.constant 0 : i32
    %2 = arith.cmpi ne, %1, %c0_i32_0 : i32
    scf.if %2 {
      %cst = arith.constant 0.000000e+00 : f32
      %10 = vector.broadcast %cst : f32 to vector<1x32xf32>
      %c0_5 = arith.constant 0 : index
      %c0_6 = arith.constant 0 : index
      %11 = vector.load %arg2[%c0_5, %c0_6] : memref<1x32xf32, #tpu.memory_space<vmem>>, vector<1x32xf32>
      tpu.vector_store %arg2[%c0_5, %c0_6], %10 {strides = array<i32>} : memref<1x32xf32, #tpu.memory_space<vmem>>, vector<1x32xf32>,
      %cst_7 = arith.constant 0.000000e+00 : f32
      %12 = vector.broadcast %cst_7 : f32 to vector<1x32xf32>
      %c0_8 = arith.constant 0 : index
      %c0_9 = arith.constant 0 : index
      %13 = vector.load %arg3[%c0_8, %c0_9] : memref<1x32xf32, #tpu.memory_space<vmem>>, vector<1x32xf32>
      tpu.vector_store %arg3[%c0_8, %c0_9], %12 {strides = array<i32>} : memref<1x32xf32, #tpu.memory_space<vmem>>, vector<1x32xf32>,
    } else {
    }
    %c0 = arith.constant 0 : index
    %c0_1 = arith.constant 0 : index
    %3 = vector.load %arg1[%c0, %c0_1] : memref<128x32xf32, #tpu.memory_space<vmem>>, vector<128x32xf32>
    %c1_i32 = arith.constant 1 : i32
    %4 = arith.cmpi ne, %arg0, %c1_i32 : i32
    %5 = arith.extui %4 : i1 to i32
    %c0_i32_2 = arith.constant 0 : i32
    %6 = arith.cmpi ne, %5, %c0_i32_2 : i32
    scf.if %6 {
      %c0_5 = arith.constant 0 : index
      %c0_6 = arith.constant 0 : index
      %10 = vector.load %arg2[%c0_5, %c0_6] : memref<1x32xf32, #tpu.memory_space<vmem>>, vector<1x32xf32>
      %cst = arith.constant dense<0.000000e+00> : vector<32xf32>
      %11 = vector.multi_reduction <add>, %3, %cst [0] : vector<128x32xf32> to vector<32xf32>
      %12 = vector.shape_cast %11 : vector<32xf32> to vector<1x32xf32>
      %13 = arith.addf %10, %12 : vector<1x32xf32>
      %c0_7 = arith.constant 0 : index
      %c0_8 = arith.constant 0 : index
      %14 = vector.load %arg2[%c0_7, %c0_8] : memref<1x32xf32, #tpu.memory_space<vmem>>, vector<1x32xf32>
      tpu.vector_store %arg2[%c0_7, %c0_8], %13 {strides = array<i32>} : memref<1x32xf32, #tpu.memory_space<vmem>>, vector<1x32xf32>,
      %c0_9 = arith.constant 0 : index
      %c0_10 = arith.constant 0 : index
      %15 = vector.load %arg3[%c0_9, %c0_10] : memref<1x32xf32, #tpu.memory_space<vmem>>, vector<1x32xf32>
      %16 = arith.mulf %3, %3 : vector<128x32xf32>
      %cst_11 = arith.constant dense<0.000000e+00> : vector<32xf32>
      %17 = vector.multi_reduction <add>, %16, %cst_11 [0] : vector<128x32xf32> to vector<32xf32>
      %18 = vector.shape_cast %17 : vector<32xf32> to vector<1x32xf32>
      %19 = arith.addf %15, %18 : vector<1x32xf32>
      %c0_12 = arith.constant 0 : index
      %c0_13 = arith.constant 0 : index
      %20 = vector.load %arg3[%c0_12, %c0_13] : memref<1x32xf32, #tpu.memory_space<vmem>>, vector<1x32xf32>
      tpu.vector_store %arg3[%c0_12, %c0_13], %19 {strides = array<i32>} : memref<1x32xf32, #tpu.memory_space<vmem>>, vector<1x32xf32>,
    } else {
    }
    %c1_i32_3 = arith.constant 1 : i32
    %7 = arith.cmpi eq, %arg0, %c1_i32_3 : i32
    %8 = arith.extui %7 : i1 to i32
    %c0_i32_4 = arith.constant 0 : i32
    %9 = arith.cmpi ne, %8, %c0_i32_4 : i32
    scf.if %9 {
      %10 = tpu.iota {dimensions = array<i32: 0>} : vector<128x32xi32>
      %c128_i32 = arith.constant 128 : i32
      %11 = arith.muli %arg0, %c128_i32 : i32
      %c200_i32 = arith.constant 200 : i32
      %12 = arith.subi %c200_i32, %11 : i32
      %13 = vector.broadcast %12 : i32 to vector<128x32xi32>
      %14 = arith.cmpi slt, %10, %13 : vector<128x32xi32>
      %cst = arith.constant 0.000000e+00 : f32
      %15 = vector.broadcast %cst : f32 to vector<128x32xf32>
      %16 = arith.select %14, %3, %15 : vector<128x32xi1>, vector<128x32xf32>
      %c0_5 = arith.constant 0 : index
      %c0_6 = arith.constant 0 : index
      %17 = vector.load %arg2[%c0_5, %c0_6] : memref<1x32xf32, #tpu.memory_space<vmem>>, vector<1x32xf32>
      %cst_7 = arith.constant dense<0.000000e+00> : vector<32xf32>
      %18 = vector.multi_reduction <add>, %16, %cst_7 [0] : vector<128x32xf32> to vector<32xf32>
      %19 = vector.shape_cast %18 : vector<32xf32> to vector<1x32xf32>
      %20 = arith.addf %17, %19 : vector<1x32xf32>
      %c0_8 = arith.constant 0 : index
      %c0_9 = arith.constant 0 : index
      %21 = vector.load %arg2[%c0_8, %c0_9] : memref<1x32xf32, #tpu.memory_space<vmem>>, vector<1x32xf32>
      tpu.vector_store %arg2[%c0_8, %c0_9], %20 {strides = array<i32>} : memref<1x32xf32, #tpu.memory_space<vmem>>, vector<1x32xf32>,
      %c0_10 = arith.constant 0 : index
      %c0_11 = arith.constant 0 : index
      %22 = vector.load %arg3[%c0_10, %c0_11] : memref<1x32xf32, #tpu.memory_space<vmem>>, vector<1x32xf32>
      %23 = arith.mulf %16, %16 : vector<128x32xf32>
      %cst_12 = arith.constant dense<0.000000e+00> : vector<32xf32>
      %24 = vector.multi_reduction <add>, %23, %cst_12 [0] : vector<128x32xf32> to vector<32xf32>
      %25 = vector.shape_cast %24 : vector<32xf32> to vector<1x32xf32>
      %26 = arith.addf %22, %25 : vector<1x32xf32>
      %c0_13 = arith.constant 0 : index
      %c0_14 = arith.constant 0 : index
      %27 = vector.load %arg3[%c0_13, %c0_14] : memref<1x32xf32, #tpu.memory_space<vmem>>, vector<1x32xf32>
      tpu.vector_store %arg3[%c0_13, %c0_14], %26 {strides = array<i32>} : memref<1x32xf32, #tpu.memory_space<vmem>>, vector<1x32xf32>,
    } else {
    }
    return
  }
  func.func @transform_0(%arg0: i32) -> (i32, i32) {
    %c0_i32 = arith.constant 0 : i32
    %c0_i32_0 = arith.constant 0 : i32
    return %arg0, %c0_i32 : i32, i32
  }
  func.func @transform_1(%arg0: i32) -> (i32, i32) {
    %c0_i32 = arith.constant 0 : i32
    %c0_i32_0 = arith.constant 0 : i32
    %c0_i32_1 = arith.constant 0 : i32
    return %c0_i32, %c0_i32_0 : i32, i32
  }
  func.func @transform_2(%arg0: i32) -> (i32, i32) {
    %c0_i32 = arith.constant 0 : i32
    %c0_i32_0 = arith.constant 0 : i32
    %c0_i32_1 = arith.constant 0 : i32
    return %c0_i32, %c0_i32_0 : i32, i32
  }
}

module attributes {stable_mosaic.version = 11 : i64} {
  func.func @_bn_act_linear_stats_kernel(%arg0: i32, %arg1: memref<128x32xf32, #tpu.memory_space<vmem>>, %arg2: memref<1x32xf32, #tpu.memory_space<vmem>>, %arg3: memref<1x32xf32, #tpu.memory_space<vmem>>, %arg4: memref<32x64xbf16, #tpu.memory_space<vmem>>, %arg5: memref<1x64xf32, #tpu.memory_space<vmem>>, %arg6: memref<128x64xbf16, #tpu.memory_space<vmem>>, %arg7: memref<1x64xf32, #tpu.memory_space<vmem>>, %arg8: memref<1x64xf32, #tpu.memory_space<vmem>>) attributes {dimension_semantics = [#tpu.dimension_semantics<arbitrary>], iteration_bounds = array<i64: 2>, scalar_prefetch = 0 : i64, scratch_operands = 0 : i64, tpu.core_type = #tpu.core_type<tc>, window_params = [{transform_indices = @transform_0, window_bounds = array<i64: 128, 32>}, {pipeline_mode = #tpu.pipeline_mode<synchronous>, transform_indices = @transform_1, window_bounds = array<i64: 1, 32>}, {pipeline_mode = #tpu.pipeline_mode<synchronous>, transform_indices = @transform_2, window_bounds = array<i64: 1, 32>}, {pipeline_mode = #tpu.pipeline_mode<synchronous>, transform_indices = @transform_3, window_bounds = array<i64: 32, 64>}, {pipeline_mode = #tpu.pipeline_mode<synchronous>, transform_indices = @transform_4, window_bounds = array<i64: 1, 64>}, {transform_indices = @transform_5, window_bounds = array<i64: 128, 64>}, {pipeline_mode = #tpu.pipeline_mode<synchronous>, transform_indices = @transform_6, window_bounds = array<i64: 1, 64>}, {pipeline_mode = #tpu.pipeline_mode<synchronous>, transform_indices = @transform_7, window_bounds = array<i64: 1, 64>}]} {
    %c0_i32 = arith.constant 0 : i32
    %0 = arith.cmpi eq, %arg0, %c0_i32 : i32
    %1 = arith.extui %0 : i1 to i32
    %c0_i32_0 = arith.constant 0 : i32
    %2 = arith.cmpi ne, %1, %c0_i32_0 : i32
    scf.if %2 {
      %cst_17 = arith.constant 0.000000e+00 : f32
      %29 = vector.broadcast %cst_17 : f32 to vector<1x64xf32>
      %c0_18 = arith.constant 0 : index
      %c0_19 = arith.constant 0 : index
      %30 = vector.load %arg7[%c0_18, %c0_19] : memref<1x64xf32, #tpu.memory_space<vmem>>, vector<1x64xf32>
      tpu.vector_store %arg7[%c0_18, %c0_19], %29 {strides = array<i32>} : memref<1x64xf32, #tpu.memory_space<vmem>>, vector<1x64xf32>,
      %cst_20 = arith.constant 0.000000e+00 : f32
      %31 = vector.broadcast %cst_20 : f32 to vector<1x64xf32>
      %c0_21 = arith.constant 0 : index
      %c0_22 = arith.constant 0 : index
      %32 = vector.load %arg8[%c0_21, %c0_22] : memref<1x64xf32, #tpu.memory_space<vmem>>, vector<1x64xf32>
      tpu.vector_store %arg8[%c0_21, %c0_22], %31 {strides = array<i32>} : memref<1x64xf32, #tpu.memory_space<vmem>>, vector<1x64xf32>,
    } else {
    }
    %c0 = arith.constant 0 : index
    %c0_1 = arith.constant 0 : index
    %3 = vector.load %arg1[%c0, %c0_1] : memref<128x32xf32, #tpu.memory_space<vmem>>, vector<128x32xf32>
    %c0_2 = arith.constant 0 : index
    %c0_3 = arith.constant 0 : index
    %4 = vector.load %arg2[%c0_2, %c0_3] : memref<1x32xf32, #tpu.memory_space<vmem>>, vector<1x32xf32>
    %5 = vector.broadcast %4 : vector<1x32xf32> to vector<128x32xf32>
    %6 = arith.mulf %3, %5 : vector<128x32xf32>
    %c0_4 = arith.constant 0 : index
    %c0_5 = arith.constant 0 : index
    %7 = vector.load %arg3[%c0_4, %c0_5] : memref<1x32xf32, #tpu.memory_space<vmem>>, vector<1x32xf32>
    %8 = vector.broadcast %7 : vector<1x32xf32> to vector<128x32xf32>
    %9 = arith.addf %6, %8 : vector<128x32xf32>
    %cst = arith.constant 0.000000e+00 : f32
    %10 = vector.broadcast %cst : f32 to vector<128x32xf32>
    %11 = arith.cmpf oge, %9, %10 : vector<128x32xf32>
    %cst_6 = arith.constant 2.000000e-01 : f32
    %12 = vector.broadcast %cst_6 : f32 to vector<128x32xf32>
    %13 = arith.mulf %12, %9 : vector<128x32xf32>
    %14 = arith.select %11, %9, %13 : vector<128x32xi1>, vector<128x32xf32>
    %15 = arith.truncf %14 : vector<128x32xf32> to vector<128x32xbf16>
    %c0_7 = arith.constant 0 : index
    %c0_8 = arith.constant 0 : index
    %16 = vector.load %arg4[%c0_7, %c0_8] : memref<32x64xbf16, #tpu.memory_space<vmem>>, vector<32x64xbf16>
    %cst_9 = arith.constant dense<0.000000e+00> : vector<128x64xf32>
    %17 = tpu.matmul %15, %16, %cst_9 {dimension_numbers = #tpu.dot_dimension_numbers<[1], [0], [0], [1], [0, 0, 1, 1], [], []>} : vector<128x32xbf16>, vector<32x64xbf16>, vector<128x64xf32> -> vector<128x64xf32>
    %c0_10 = arith.constant 0 : index
    %c0_11 = arith.constant 0 : index
    %18 = vector.load %arg5[%c0_10, %c0_11] : memref<1x64xf32, #tpu.memory_space<vmem>>, vector<1x64xf32>
    %19 = vector.broadcast %18 : vector<1x64xf32> to vector<128x64xf32>
    %20 = arith.addf %17, %19 : vector<128x64xf32>
    %21 = arith.truncf %20 : vector<128x64xf32> to vector<128x64xbf16>
    %c0_12 = arith.constant 0 : index
    %c0_13 = arith.constant 0 : index
    %22 = vector.load %arg6[%c0_12, %c0_13] : memref<128x64xbf16, #tpu.memory_space<vmem>>, vector<128x64xbf16>
    tpu.vector_store %arg6[%c0_12, %c0_13], %21 {strides = array<i32>} : memref<128x64xbf16, #tpu.memory_space<vmem>>, vector<128x64xbf16>,
    %c1_i32 = arith.constant 1 : i32
    %23 = arith.cmpi ne, %arg0, %c1_i32 : i32
    %24 = arith.extui %23 : i1 to i32
    %c0_i32_14 = arith.constant 0 : i32
    %25 = arith.cmpi ne, %24, %c0_i32_14 : i32
    scf.if %25 {
      %c0_17 = arith.constant 0 : index
      %c0_18 = arith.constant 0 : index
      %29 = vector.load %arg7[%c0_17, %c0_18] : memref<1x64xf32, #tpu.memory_space<vmem>>, vector<1x64xf32>
      %cst_19 = arith.constant dense<0.000000e+00> : vector<64xf32>
      %30 = vector.multi_reduction <add>, %20, %cst_19 [0] : vector<128x64xf32> to vector<64xf32>
      %31 = vector.shape_cast %30 : vector<64xf32> to vector<1x64xf32>
      %32 = arith.addf %29, %31 : vector<1x64xf32>
      %c0_20 = arith.constant 0 : index
      %c0_21 = arith.constant 0 : index
      %33 = vector.load %arg7[%c0_20, %c0_21] : memref<1x64xf32, #tpu.memory_space<vmem>>, vector<1x64xf32>
      tpu.vector_store %arg7[%c0_20, %c0_21], %32 {strides = array<i32>} : memref<1x64xf32, #tpu.memory_space<vmem>>, vector<1x64xf32>,
      %c0_22 = arith.constant 0 : index
      %c0_23 = arith.constant 0 : index
      %34 = vector.load %arg8[%c0_22, %c0_23] : memref<1x64xf32, #tpu.memory_space<vmem>>, vector<1x64xf32>
      %35 = arith.mulf %20, %20 : vector<128x64xf32>
      %cst_24 = arith.constant dense<0.000000e+00> : vector<64xf32>
      %36 = vector.multi_reduction <add>, %35, %cst_24 [0] : vector<128x64xf32> to vector<64xf32>
      %37 = vector.shape_cast %36 : vector<64xf32> to vector<1x64xf32>
      %38 = arith.addf %34, %37 : vector<1x64xf32>
      %c0_25 = arith.constant 0 : index
      %c0_26 = arith.constant 0 : index
      %39 = vector.load %arg8[%c0_25, %c0_26] : memref<1x64xf32, #tpu.memory_space<vmem>>, vector<1x64xf32>
      tpu.vector_store %arg8[%c0_25, %c0_26], %38 {strides = array<i32>} : memref<1x64xf32, #tpu.memory_space<vmem>>, vector<1x64xf32>,
    } else {
    }
    %c1_i32_15 = arith.constant 1 : i32
    %26 = arith.cmpi eq, %arg0, %c1_i32_15 : i32
    %27 = arith.extui %26 : i1 to i32
    %c0_i32_16 = arith.constant 0 : i32
    %28 = arith.cmpi ne, %27, %c0_i32_16 : i32
    scf.if %28 {
      %29 = tpu.iota {dimensions = array<i32: 0>} : vector<128x64xi32>
      %c128_i32 = arith.constant 128 : i32
      %30 = arith.muli %arg0, %c128_i32 : i32
      %c200_i32 = arith.constant 200 : i32
      %31 = arith.subi %c200_i32, %30 : i32
      %32 = vector.broadcast %31 : i32 to vector<128x64xi32>
      %33 = arith.cmpi slt, %29, %32 : vector<128x64xi32>
      %cst_17 = arith.constant 0.000000e+00 : f32
      %34 = vector.broadcast %cst_17 : f32 to vector<128x64xf32>
      %35 = arith.select %33, %20, %34 : vector<128x64xi1>, vector<128x64xf32>
      %c0_18 = arith.constant 0 : index
      %c0_19 = arith.constant 0 : index
      %36 = vector.load %arg7[%c0_18, %c0_19] : memref<1x64xf32, #tpu.memory_space<vmem>>, vector<1x64xf32>
      %cst_20 = arith.constant dense<0.000000e+00> : vector<64xf32>
      %37 = vector.multi_reduction <add>, %35, %cst_20 [0] : vector<128x64xf32> to vector<64xf32>
      %38 = vector.shape_cast %37 : vector<64xf32> to vector<1x64xf32>
      %39 = arith.addf %36, %38 : vector<1x64xf32>
      %c0_21 = arith.constant 0 : index
      %c0_22 = arith.constant 0 : index
      %40 = vector.load %arg7[%c0_21, %c0_22] : memref<1x64xf32, #tpu.memory_space<vmem>>, vector<1x64xf32>
      tpu.vector_store %arg7[%c0_21, %c0_22], %39 {strides = array<i32>} : memref<1x64xf32, #tpu.memory_space<vmem>>, vector<1x64xf32>,
      %c0_23 = arith.constant 0 : index
      %c0_24 = arith.constant 0 : index
      %41 = vector.load %arg8[%c0_23, %c0_24] : memref<1x64xf32, #tpu.memory_space<vmem>>, vector<1x64xf32>
      %42 = arith.mulf %35, %35 : vector<128x64xf32>
      %cst_25 = arith.constant dense<0.000000e+00> : vector<64xf32>
      %43 = vector.multi_reduction <add>, %42, %cst_25 [0] : vector<128x64xf32> to vector<64xf32>
      %44 = vector.shape_cast %43 : vector<64xf32> to vector<1x64xf32>
      %45 = arith.addf %41, %44 : vector<1x64xf32>
      %c0_26 = arith.constant 0 : index
      %c0_27 = arith.constant 0 : index
      %46 = vector.load %arg8[%c0_26, %c0_27] : memref<1x64xf32, #tpu.memory_space<vmem>>, vector<1x64xf32>
      tpu.vector_store %arg8[%c0_26, %c0_27], %45 {strides = array<i32>} : memref<1x64xf32, #tpu.memory_space<vmem>>, vector<1x64xf32>,
    } else {
    }
    return
  }
  func.func @transform_0(%arg0: i32) -> (i32, i32) {
    %c0_i32 = arith.constant 0 : i32
    %c0_i32_0 = arith.constant 0 : i32
    return %arg0, %c0_i32 : i32, i32
  }
  func.func @transform_1(%arg0: i32) -> (i32, i32) {
    %c0_i32 = arith.constant 0 : i32
    %c0_i32_0 = arith.constant 0 : i32
    %c0_i32_1 = arith.constant 0 : i32
    return %c0_i32, %c0_i32_0 : i32, i32
  }
  func.func @transform_2(%arg0: i32) -> (i32, i32) {
    %c0_i32 = arith.constant 0 : i32
    %c0_i32_0 = arith.constant 0 : i32
    %c0_i32_1 = arith.constant 0 : i32
    return %c0_i32, %c0_i32_0 : i32, i32
  }
  func.func @transform_3(%arg0: i32) -> (i32, i32) {
    %c0_i32 = arith.constant 0 : i32
    %c0_i32_0 = arith.constant 0 : i32
    %c0_i32_1 = arith.constant 0 : i32
    return %c0_i32, %c0_i32_0 : i32, i32
  }
  func.func @transform_4(%arg0: i32) -> (i32, i32) {
    %c0_i32 = arith.constant 0 : i32
    %c0_i32_0 = arith.constant 0 : i32
    %c0_i32_1 = arith.constant 0 : i32
    return %c0_i32, %c0_i32_0 : i32, i32
  }
  func.func @transform_5(%arg0: i32) -> (i32, i32) {
    %c0_i32 = arith.constant 0 : i32
    %c0_i32_0 = arith.constant 0 : i32
    return %arg0, %c0_i32 : i32, i32
  }
  func.func @transform_6(%arg0: i32) -> (i32, i32) {
    %c0_i32 = arith.constant 0 : i32
    %c0_i32_0 = arith.constant 0 : i32
    %c0_i32_1 = arith.constant 0 : i32
    return %c0_i32, %c0_i32_0 : i32, i32
  }
  func.func @transform_7(%arg0: i32) -> (i32, i32) {
    %c0_i32 = arith.constant 0 : i32
    %c0_i32_0 = arith.constant 0 : i32
    %c0_i32_1 = arith.constant 0 : i32
    return %c0_i32, %c0_i32_0 : i32, i32
  }
}

module attributes {stable_mosaic.version = 11 : i64} {
  func.func @_bn_act_linear_kernel(%arg0: i32, %arg1: memref<128x64xbf16, #tpu.memory_space<vmem>>, %arg2: memref<1x64xf32, #tpu.memory_space<vmem>>, %arg3: memref<1x64xf32, #tpu.memory_space<vmem>>, %arg4: memref<64x16xbf16, #tpu.memory_space<vmem>>, %arg5: memref<1x16xf32, #tpu.memory_space<vmem>>, %arg6: memref<128x16xf32, #tpu.memory_space<vmem>>) attributes {dimension_semantics = [#tpu.dimension_semantics<parallel>], iteration_bounds = array<i64: 2>, scalar_prefetch = 0 : i64, scratch_operands = 0 : i64, tpu.core_type = #tpu.core_type<tc>, window_params = [{transform_indices = @transform_0, window_bounds = array<i64: 128, 64>}, {pipeline_mode = #tpu.pipeline_mode<synchronous>, transform_indices = @transform_1, window_bounds = array<i64: 1, 64>}, {pipeline_mode = #tpu.pipeline_mode<synchronous>, transform_indices = @transform_2, window_bounds = array<i64: 1, 64>}, {pipeline_mode = #tpu.pipeline_mode<synchronous>, transform_indices = @transform_3, window_bounds = array<i64: 64, 16>}, {pipeline_mode = #tpu.pipeline_mode<synchronous>, transform_indices = @transform_4, window_bounds = array<i64: 1, 16>}, {transform_indices = @transform_5, window_bounds = array<i64: 128, 16>}]} {
    %c0 = arith.constant 0 : index
    %c0_0 = arith.constant 0 : index
    %0 = vector.load %arg1[%c0, %c0_0] : memref<128x64xbf16, #tpu.memory_space<vmem>>, vector<128x64xbf16>
    %1 = arith.extf %0 : vector<128x64xbf16> to vector<128x64xf32>
    %c0_1 = arith.constant 0 : index
    %c0_2 = arith.constant 0 : index
    %2 = vector.load %arg2[%c0_1, %c0_2] : memref<1x64xf32, #tpu.memory_space<vmem>>, vector<1x64xf32>
    %3 = vector.broadcast %2 : vector<1x64xf32> to vector<128x64xf32>
    %4 = arith.mulf %1, %3 : vector<128x64xf32>
    %c0_3 = arith.constant 0 : index
    %c0_4 = arith.constant 0 : index
    %5 = vector.load %arg3[%c0_3, %c0_4] : memref<1x64xf32, #tpu.memory_space<vmem>>, vector<1x64xf32>
    %6 = vector.broadcast %5 : vector<1x64xf32> to vector<128x64xf32>
    %7 = arith.addf %4, %6 : vector<128x64xf32>
    %cst = arith.constant 0.000000e+00 : f32
    %8 = vector.broadcast %cst : f32 to vector<128x64xf32>
    %9 = arith.cmpf oge, %7, %8 : vector<128x64xf32>
    %cst_5 = arith.constant 2.000000e-01 : f32
    %10 = vector.broadcast %cst_5 : f32 to vector<128x64xf32>
    %11 = arith.mulf %10, %7 : vector<128x64xf32>
    %12 = arith.select %9, %7, %11 : vector<128x64xi1>, vector<128x64xf32>
    %13 = arith.truncf %12 : vector<128x64xf32> to vector<128x64xbf16>
    %c0_6 = arith.constant 0 : index
    %c0_7 = arith.constant 0 : index
    %14 = vector.load %arg4[%c0_6, %c0_7] : memref<64x16xbf16, #tpu.memory_space<vmem>>, vector<64x16xbf16>
    %cst_8 = arith.constant dense<0.000000e+00> : vector<128x16xf32>
    %15 = tpu.matmul %13, %14, %cst_8 {dimension_numbers = #tpu.dot_dimension_numbers<[1], [0], [0], [1], [0, 0, 1, 1], [], []>} : vector<128x64xbf16>, vector<64x16xbf16>, vector<128x16xf32> -> vector<128x16xf32>
    %c0_9 = arith.constant 0 : index
    %c0_10 = arith.constant 0 : index
    %16 = vector.load %arg5[%c0_9, %c0_10] : memref<1x16xf32, #tpu.memory_space<vmem>>, vector<1x16xf32>
    %17 = vector.broadcast %16 : vector<1x16xf32> to vector<128x16xf32>
    %18 = arith.addf %15, %17 : vector<128x16xf32>
    %c0_11 = arith.constant 0 : index
    %c0_12 = arith.constant 0 : index
    %19 = vector.load %arg6[%c0_11, %c0_12] : memref<128x16xf32, #tpu.memory_space<vmem>>, vector<128x16xf32>
    tpu.vector_store %arg6[%c0_11, %c0_12], %18 {strides = array<i32>} : memref<128x16xf32, #tpu.memory_space<vmem>>, vector<128x16xf32>,
    return
  }
  func.func @transform_0(%arg0: i32) -> (i32, i32) {
    %c0_i32 = arith.constant 0 : i32
    %c0_i32_0 = arith.constant 0 : i32
    return %arg0, %c0_i32 : i32, i32
  }
  func.func @transform_1(%arg0: i32) -> (i32, i32) {
    %c0_i32 = arith.constant 0 : i32
    %c0_i32_0 = arith.constant 0 : i32
    %c0_i32_1 = arith.constant 0 : i32
    return %c0_i32, %c0_i32_0 : i32, i32
  }
  func.func @transform_2(%arg0: i32) -> (i32, i32) {
    %c0_i32 = arith.constant 0 : i32
    %c0_i32_0 = arith.constant 0 : i32
    %c0_i32_1 = arith.constant 0 : i32
    return %c0_i32, %c0_i32_0 : i32, i32
  }
  func.func @transform_3(%arg0: i32) -> (i32, i32) {
    %c0_i32 = arith.constant 0 : i32
    %c0_i32_0 = arith.constant 0 : i32
    %c0_i32_1 = arith.constant 0 : i32
    return %c0_i32, %c0_i32_0 : i32, i32
  }
  func.func @transform_4(%arg0: i32) -> (i32, i32) {
    %c0_i32 = arith.constant 0 : i32
    %c0_i32_0 = arith.constant 0 : i32
    %c0_i32_1 = arith.constant 0 : i32
    return %c0_i32, %c0_i32_0 : i32, i32
  }
  func.func @transform_5(%arg0: i32) -> (i32, i32) {
    %c0_i32 = arith.constant 0 : i32
    %c0_i32_0 = arith.constant 0 : i32
    return %arg0, %c0_i32 : i32, i32
  }
}

</mosaic_0001>

<llo_original>
// kernel: mlp_forward.3
$region0: #{mlp_forward.3}
  #allocation0 [shape = 'u32[]', space=smem, size = 0x4, offset = 0x4, fixed_abs, tag = 'smem constant byte address 0x4 - core index']
  #allocation1 [shape = 'u32[144,128]{1,0:T(1,128)}', space=vmem, size = 0x12000, scoped, tag = 'internal scratch']
  %s0 = inlined_call_operand.vmem [shape: f32[200,32], index: 0, kind: input, shape index: {}]
  %s1 = inlined_call_operand.vmem [shape: f32[1,32], index: 1, kind: output, shape index: {0}]
  %s2 = inlined_call_operand.vmem [shape: f32[1,32], index: 2, kind: output, shape index: {1}]
  %3 = xla_tuple %s1, %s2
  %s4 = sld [smem:[#allocation0]]
  $region57: #{mlp_forward.3} parent=0
    _
  %s6 = ssub.s32 1, %s4
  %s7 = scalar_select 0, %s6, %s4
  loop: start=0, step=1, limit=4
  $region2: #{mlp_forward.3} parent=0 // loop_pre_header
    _
  $region3: #{mlp_forward.3} parent=0 // loop_header
    %s9 = sphi 0, %s13
    %p10 = scmp.ge.s32.totalorder %s9, 4
    %s19 = sphi 0, %s21
    %s22 = sphi 0, %s19
    %s23 = sphi 0, %s22
    %s39 = sphi 0, %s23
    %s43 = sphi 0, %s43
    %s45 = sphi 0, %s43
    %s46 = sphi 0, %s45
    %s60 = sphi 0, %s46
    %s64 = sphi 0, %s64
    %s66 = sphi 0, %s64
    %s67 = sphi 0, %s66
    %s81 = sphi 0, %s67
  $region4: #{mlp_forward.3} parent=0 // loop_header_branch
    %12 = sbr.rel (%p10) target = $region8
  $region5: #{mlp_forward.3} parent=0 // loop_body
    %s14 = ssub.s32 %s9, 1
    %s15 = ssub.s32 %s9, 2
    %s16 = sadd.s32 %s9, 1
    %s17 = ssub.s32 %s9, %s16
    %p18 = scmp.eq.s32.totalorder %s17, 0
    %s20 = sadd.s32 %s19, 1
    %s21 = scalar_select %p18, %s19, %s20
    %p24 = pneg %p18
    %p25 = scmp.eq.s32.totalorder %s9, 1
    %p26 = por %p24, %p25
    %p27 = scmp.ne.s32.totalorder %s19, %s22
    %p28 = scmp.eq.s32.totalorder %s9, 0
    %p29 = por %p27, %p28
    %p30 = scmp.ne.s32.totalorder %s19, %s22
    %p31 = scmp.eq.s32.totalorder %s14, 1
    %p32 = por %p30, %p31
    %p33 = scmp.ne.s32.totalorder %s22, %s23
    %p34 = scmp.eq.s32.totalorder %s14, 0
    %p35 = por %p33, %p34
    %p36 = scmp.ne.s32.totalorder %s22, %s23
    %p37 = scmp.eq.s32.totalorder %s15, 1
    %p38 = por %p36, %p37
    %p40 = scmp.ne.s32.totalorder %s23, %s39
    %p41 = scmp.eq.s32.totalorder %s15, 0
    %p42 = por %p40, %p41
    %s44 = sadd.s32 %s43, 1
    %p47 = scmp.eq.s32.totalorder %s9, 1
    %p48 = scmp.ne.s32.totalorder %s43, %s45
    %p49 = scmp.eq.s32.totalorder %s9, 0
    %p50 = por %p48, %p49
    %p51 = scmp.ne.s32.totalorder %s43, %s45
    %p52 = scmp.eq.s32.totalorder %s14, 1
    %p53 = por %p51, %p52
    %p54 = scmp.ne.s32.totalorder %s45, %s46
    %p55 = scmp.eq.s32.totalorder %s14, 0
    %p56 = por %p54, %p55
    %p57 = scmp.ne.s32.totalorder %s45, %s46
    %p58 = scmp.eq.s32.totalorder %s15, 1
    %p59 = por %p57, %p58
    %p61 = scmp.ne.s32.totalorder %s46, %s60
    %p62 = scmp.eq.s32.totalorder %s15, 0
    %p63 = por %p61, %p62
    %s65 = sadd.s32 %s64, 1
    %p68 = scmp.eq.s32.totalorder %s9, 1
    %p69 = scmp.ne.s32.totalorder %s64, %s66
    %p70 = scmp.eq.s32.totalorder %s9, 0
    %p71 = por %p69, %p70
    %p72 = scmp.ne.s32.totalorder %s64, %s66
    %p73 = scmp.eq.s32.totalorder %s14, 1
    %p74 = por %p72, %p73
    %p75 = scmp.ne.s32.totalorder %s66, %s67
    %p76 = scmp.eq.s32.totalorder %s14, 0
    %p77 = por %p75, %p76
    %p78 = scmp.ne.s32.totalorder %s66, %s67
    %p79 = scmp.eq.s32.totalorder %s15, 1
    %p80 = por %p78, %p79
    %p82 = scmp.ne.s32.totalorder %s67, %s81
    %p83 = scmp.eq.s32.totalorder %s15, 0
    %p84 = por %p82, %p83
    %p85 = scmp.le.s32.totalorder 1, %s9
    %p86 = scmp.lt.s32.totalorder %s9, 3
    %p87 = pnand %p85, %p86
    %p88 = pneg %p87
    // Predicated region
    $region9: #{mlp_forward.3} parent=5 // pred_check
      _
    $region10: #{mlp_forward.3} parent=5 // pred_check_branch
      %90 = sbr.rel (%p87) target = $region12
    $region11: #{mlp_forward.3} parent=5 // pred_region
      %s91 = ssub.s32 %s9, 1
    $region12: #{mlp_forward.3} parent=5 // pred_fallthru
      _
    %p92 = scmp.lt.s32.totalorder %s9, 2
    // Predicated region
    $region13: #{mlp_forward.3} parent=5 // pred_check
      %p93 = pneg %p92
    $region14: #{mlp_forward.3} parent=5 // pred_check_branch
      %95 = sbr.rel (%p93) target = $region16
    $region15: #{mlp_forward.3} parent=5 // pred_region
      // Predicated region
      $region17: #{mlp_forward.3} parent=15 // pred_check
        %p96 = pneg %p29
      $region18: #{mlp_forward.3} parent=15 // pred_check_branch
        %98 = sbr.rel (%p96) target = $region20
      $region19: #{mlp_forward.3} parent=15 // pred_region
        %s99 = smul.u32 16, %s9
        %s100 = ssub.s32 25, %s99
        %p101 = scmp.lt.s32.totalorder %s100, 16
        %s102 = scalar_select %p101, %s100, 16
        %s103 = smul.u32 128, %s102
        %p104 = scmp.lt.s32.totalorder %s99, 24
        %s105 = scalar_select %p104, %s99, 24
        %s106 = smul.addr %s105, 8
        %s107 = scalar_lea.vmem %s0, %s106
        %s108 = smul.u32 16, %s9
        %s109 = ssub.s32 25, %s108
        %p110 = scmp.lt.s32.totalorder %s109, 16
        %s111 = scalar_select %p110, %s109, 16
        %s112 = smul.u32 128, %s111
      $region20: #{mlp_forward.3} parent=15 // pred_fallthru
        _
    $region16: #{mlp_forward.3} parent=5 // pred_fallthru
      _
    %p113 = scmp.le.s32.totalorder 1, %s9
    %p114 = scmp.lt.s32.totalorder %s9, 3
    %p115 = pnand %p113, %p114
    %p116 = pneg %p115
    // Predicated region
    $region21: #{mlp_forward.3} parent=5 // pred_check
      _
    $region22: #{mlp_forward.3} parent=5 // pred_check_branch
      %118 = sbr.rel (%p115) target = $region24
    $region23: #{mlp_forward.3} parent=5 // pred_region
      %s119 = ssub.s32 %s9, 1
      %s120 = smul.u32 16, %s14
      %s121 = ssub.s32 25, %s120
      %p122 = scmp.lt.s32.totalorder %s121, 16
      %s123 = scalar_select %p122, %s121, 16
      %s124 = smul.u32 128, %s123
      %p125 = scmp.lt.s32.totalorder %s120, 24
      %s126 = scalar_select %p125, %s120, 24
      %s127 = smul.addr %s126, 8
      %s128 = scalar_lea.vmem %s0, %s127
      %p129 = pneg %p35
      %p130 = pneg %p32
      %p131 = pneg %p56
      %p132 = pneg %p53
      %p133 = pneg %p77
      %p134 = pneg %p74
      %s135 = smul.u32 16, %s14
      %s136 = ssub.s32 25, %s135
      %p137 = scmp.lt.s32.totalorder %s136, 16
      %s138 = scalar_select %p137, %s136, 16
      %s139 = smul.u32 128, %s138
      %p140 = scmp.lt.s32.totalorder %s135, 24
      %s141 = scalar_select %p140, %s135, 24
      %s142 = smul.addr %s141, 8
      %s143 = scalar_lea.vmem %s0, %s142
      %s144 = smul.u32 16, %s14
      %s145 = ssub.s32 25, %s144
      %p146 = scmp.lt.s32.totalorder %s145, 16
      %s147 = scalar_select %p146, %s145, 16
      %s148 = smul.u32 128, %s147
      %p149 = scmp.eq.s32.totalorder %s14, 0
      // Predicated region
      $region25: #{mlp_forward.3} parent=23 // pred_check
        %p150 = pneg %p149
      $region26: #{mlp_forward.3} parent=23 // pred_check_branch
        %152 = sbr.rel (%p150) target = $region28
      $region27: #{mlp_forward.3} parent=23 // pred_region
        %vm153 = vcmask 253952
        %154 = vst.msk [vmem:[%s1] sm:$0x1] %vm153, 0.0
        %155 = vst.msk [vmem:[%s2] sm:$0x1] %vm153, 0.0
      $region28: #{mlp_forward.3} parent=23 // pred_fallthru
        _
      %v156 = vld [vmem:[%s143] sm:$0xff]
      %v157 = vld [vmem:[%s143 + $0x8] sm:$0xff]
      %v158 = vld [vmem:[%s143 + $0x10] sm:$0xff]
      %v159 = vld [vmem:[%s143 + $0x18] sm:$0xff]
      %v160 = vld [vmem:[%s143 + $0x20] sm:$0xff]
      %v161 = vld [vmem:[%s143 + $0x28] sm:$0xff]
      %v162 = vld [vmem:[%s143 + $0x30] sm:$0xff]
      %v163 = vld [vmem:[%s143 + $0x38] sm:$0xff]
      %v164 = vld [vmem:[%s143 + $0x40] sm:$0xff]
      %v165 = vld [vmem:[%s143 + $0x48] sm:$0xff]
      %v166 = vld [vmem:[%s143 + $0x50] sm:$0xff]
      %v167 = vld [vmem:[%s143 + $0x58] sm:$0xff]
      %v168 = vld [vmem:[%s143 + $0x60] sm:$0xff]
      %v169 = vld [vmem:[%s143 + $0x68] sm:$0xff]
      %v170 = vld [vmem:[%s143 + $0x70] sm:$0xff]
      %v171 = vld [vmem:[%s143 + $0x78] sm:$0xff]
      %p172 = scmp.ne.s32.totalorder %s14, 1
      // Predicated region
      $region29: #{mlp_forward.3} parent=23 // pred_check
        %p173 = pneg %p172
      $region30: #{mlp_forward.3} parent=23 // pred_check_branch
        %175 = sbr.rel (%p173) target = $region32
      $region31: #{mlp_forward.3} parent=23 // pred_region
        %v176 = vld [vmem:[%s1] sm:$0x1]
        %vm177 = vcmask 261120
        %v178 = vsel %vm177, %v156, 0.0
        %v179 = vsel %vm177, %v157, 0.0
        %v180 = vadd.f32 %v178, %v179
        %v181 = vsel %vm177, %v158, 0.0
        %v182 = vadd.f32 %v180, %v181
        %v183 = vsel %vm177, %v159, 0.0
        %v184 = vadd.f32 %v182, %v183
        %v185 = vsel %vm177, %v160, 0.0
        %v186 = vadd.f32 %v184, %v185
        %v187 = vsel %vm177, %v161, 0.0
        %v188 = vadd.f32 %v186, %v187
        %v189 = vsel %vm177, %v162, 0.0
        %v190 = vadd.f32 %v188, %v189
        %v191 = vsel %vm177, %v163, 0.0
        %v192 = vadd.f32 %v190, %v191
        %v193 = vsel %vm177, %v164, 0.0
        %v194 = vadd.f32 %v192, %v193
        %v195 = vsel %vm177, %v165, 0.0
        %v196 = vadd.f32 %v194, %v195
        %v197 = vsel %vm177, %v166, 0.0
        %v198 = vadd.f32 %v196, %v197
        %v199 = vsel %vm177, %v167, 0.0
        %v200 = vadd.f32 %v198, %v199
        %v201 = vsel %vm177, %v168, 0.0
        %v202 = vadd.f32 %v200, %v201
        %v203 = vsel %vm177, %v169, 0.0
        %v204 = vadd.f32 %v202, %v203
        %v205 = vsel %vm177, %v170, 0.0
        %v206 = vadd.f32 %v204, %v205
        %v207 = vsel %vm177, %v171, 0.0
        %v208 = vadd.f32 %v206, %v207
        %v209 = vrot.slane %v208, 4
        %v210 = vadd.f32 %v208, %v209
        %v211 = vrot.slane %v210, 2
        %v212 = vadd.f32 %v210, %v211
        %v213 = vrot.slane %v212, 1
        %v214 = vadd.f32 %v212, %v213
        %v215 = vadd.f32 %v176, %v214
        %vm216 = vcmask 253952
        %217 = vst.msk [vmem:[%s1] sm:$0x1] %vm216, %v215
        %v218 = vld [vmem:[%s2] sm:$0x1]
        %v219 = vmul.f32 %v156, %v156
        %v220 = vmul.f32 %v157, %v157
        %v221 = vmul.f32 %v158, %v158
        %v222 = vmul.f32 %v159, %v159
        %v223 = vmul.f32 %v160, %v160
        %v224 = vmul.f32 %v161, %v161
        %v225 = vmul.f32 %v162, %v162
        %v226 = vmul.f32 %v163, %v163
        %v227 = vmul.f32 %v164, %v164
        %v228 = vmul.f32 %v165, %v165
        %v229 = vmul.f32 %v166, %v166
        %v230 = vmul.f32 %v167, %v167
        %v231 = vmul.f32 %v168, %v168
        %v232 = vmul.f32 %v169, %v169
        %v233 = vmul.f32 %v170, %v170
        %v234 = vmul.f32 %v171, %v171
        %v235 = vsel %vm177, %v219, 0.0
        %v236 = vsel %vm177, %v220, 0.0
        %v237 = vadd.f32 %v235, %v236
        %v238 = vsel %vm177, %v221, 0.0
        %v239 = vadd.f32 %v237, %v238
        %v240 = vsel %vm177, %v222, 0.0
        %v241 = vadd.f32 %v239, %v240
        %v242 = vsel %vm177, %v223, 0.0
        %v243 = vadd.f32 %v241, %v242
        %v244 = vsel %vm177, %v224, 0.0
        %v245 = vadd.f32 %v243, %v244
        %v246 = vsel %vm177, %v225, 0.0
        %v247 = vadd.f32 %v245, %v246
        %v248 = vsel %vm177, %v226, 0.0
        %v249 = vadd.f32 %v247, %v248
        %v250 = vsel %vm177, %v227, 0.0
        %v251 = vadd.f32 %v249, %v250
        %v252 = vsel %vm177, %v228, 0.0
        %v253 = vadd.f32 %v251, %v252
        %v254 = vsel %vm177, %v229, 0.0
        %v255 = vadd.f32 %v253, %v254
        %v256 = vsel %vm177, %v230, 0.0
        %v257 = vadd.f32 %v255, %v256
        %v258 = vsel %vm177, %v231, 0.0
        %v259 = vadd.f32 %v257, %v258
        %v260 = vsel %vm177, %v232, 0.0
        %v261 = vadd.f32 %v259, %v260
        %v262 = vsel %vm177, %v233, 0.0
        %v263 = vadd.f32 %v261, %v262
        %v264 = vsel %vm177, %v234, 0.0
        %v265 = vadd.f32 %v263, %v264
        %v266 = vrot.slane %v265, 4
        %v267 = vadd.f32 %v265, %v266
        %v268 = vrot.slane %v267, 2
        %v269 = vadd.f32 %v267, %v268
        %v270 = vrot.slane %v269, 1
        %v271 = vadd.f32 %v269, %v270
        %v272 = vadd.f32 %v218, %v271
        %273 = vst.msk [vmem:[%s2] sm:$0x1] %vm216, %v272
      $region32: #{mlp_forward.3} parent=23 // pred_fallthru
        _
      %p274 = scmp.eq.s32.totalorder %s14, 1
      // Predicated region
      $region33: #{mlp_forward.3} parent=23 // pred_check
        %p275 = pneg %p274
      $region34: #{mlp_forward.3} parent=23 // pred_check_branch
        %277 = sbr.rel (%p275) target = $region36
      $region35: #{mlp_forward.3} parent=23 // pred_region
        %v278 = vlaneseq
        %v279 = vshrl.u32 %v278, 7
        %v280 = vadd.s32 %v279, 8
        %v281 = vadd.s32 %v279, 16
        %v282 = vadd.s32 %v279, 24
        %v283 = vadd.s32 %v279, 32
        %v284 = vadd.s32 %v279, 40
        %v285 = vadd.s32 %v279, 48
        %v286 = vadd.s32 %v279, 56
        %v287 = vadd.s32 %v279, 64
        %v288 = vadd.s32 %v279, 72
        %v289 = vadd.s32 %v279, 80
        %v290 = vadd.s32 %v279, 88
        %v291 = vadd.s32 %v279, 96
        %v292 = vadd.s32 %v279, 104
        %v293 = vadd.s32 %v279, 112
        %v294 = vadd.s32 %v279, 120
        %s295 = smul.u32 %s14, 128
        %s296 = ssub.s32 200, %s295
        %v297 = vstv %s296
        %vm298 = vcmp.lt.s32.totalorder %v279, %v297
        %vm299 = vcmp.lt.s32.totalorder %v280, %v297
        %vm300 = vcmp.lt.s32.totalorder %v281, %v297
        %vm301 = vcmp.lt.s32.totalorder %v282, %v297
        %vm302 = vcmp.lt.s32.totalorder %v283, %v297
        %vm303 = vcmp.lt.s32.totalorder %v284, %v297
        %vm304 = vcmp.lt.s32.totalorder %v285, %v297
        %vm305 = vcmp.lt.s32.totalorder %v286, %v297
        %vm306 = vcmp.lt.s32.totalorder %v287, %v297
        %vm307 = vcmp.lt.s32.totalorder %v288, %v297
        %vm308 = vcmp.lt.s32.totalorder %v289, %v297
        %vm309 = vcmp.lt.s32.totalorder %v290, %v297
        %vm310 = vcmp.lt.s32.totalorder %v291, %v297
        %vm311 = vcmp.lt.s32.totalorder %v292, %v297
        %vm312 = vcmp.lt.s32.totalorder %v293, %v297
        %vm313 = vcmp.lt.s32.totalorder %v294, %v297
        %v314 = vsel %vm298, %v156, 0.0
        %v315 = vsel %vm299, %v157, 0.0
        %v316 = vsel %vm300, %v158, 0.0
        %v317 = vsel %vm301, %v159, 0.0
        %v318 = vsel %vm302, %v160, 0.0
        %v319 = vsel %vm303, %v161, 0.0
        %v320 = vsel %vm304, %v162, 0.0
        %v321 = vsel %vm305, %v163, 0.0
        %v322 = vsel %vm306, %v164, 0.0
        %v323 = vsel %vm307, %v165, 0.0
        %v324 = vsel %vm308, %v166, 0.0
        %v325 = vsel %vm309, %v167, 0.0
        %v326 = vsel %vm310, %v168, 0.0
        %v327 = vsel %vm311, %v169, 0.0
        %v328 = vsel %vm312, %v170, 0.0
        %v329 = vsel %vm313, %v171, 0.0
        %v330 = vld [vmem:[%s1] sm:$0x1]
        %vm331 = vcmask 261120
        %v332 = vsel %vm331, %v314, 0.0
        %v333 = vsel %vm331, %v315, 0.0
        %v334 = vadd.f32 %v332, %v333
        %v335 = vsel %vm331, %v316, 0.0
        %v336 = vadd.f32 %v334, %v335
        %v337 = vsel %vm331, %v317, 0.0
        %v338 = vadd.f32 %v336, %v337
        %v339 = vsel %vm331, %v318, 0.0
        %v340 = vadd.f32 %v338, %v339
        %v341 = vsel %vm331, %v319, 0.0
        %v342 = vadd.f32 %v340, %v341
        %v343 = vsel %vm331, %v320, 0.0
        %v344 = vadd.f32 %v342, %v343
        %v345 = vsel %vm331, %v321, 0.0
        %v346 = vadd.f32 %v344, %v345
        %v347 = vsel %vm331, %v322, 0.0
        %v348 = vadd.f32 %v346, %v347
        %v349 = vsel %vm331, %v323, 0.0
        %v350 = vadd.f32 %v348, %v349
        %v351 = vsel %vm331, %v324, 0.0
        %v352 = vadd.f32 %v350, %v351
        %v353 = vsel %vm331, %v325, 0.0
        %v354 = vadd.f32 %v352, %v353
        %v355 = vsel %vm331, %v326, 0.0
        %v356 = vadd.f32 %v354, %v355
        %v357 = vsel %vm331, %v327, 0.0
        %v358 = vadd.f32 %v356, %v357
        %v359 = vsel %vm331, %v328, 0.0
        %v360 = vadd.f32 %v358, %v359
        %v361 = vsel %vm331, %v329, 0.0
        %v362 = vadd.f32 %v360, %v361
        %v363 = vrot.slane %v362, 4
        %v364 = vadd.f32 %v362, %v363
        %v365 = vrot.slane %v364, 2
        %v366 = vadd.f32 %v364, %v365
        %v367 = vrot.slane %v366, 1
        %v368 = vadd.f32 %v366, %v367
        %v369 = vadd.f32 %v330, %v368
        %vm370 = vcmask 253952
        %371 = vst.msk [vmem:[%s1] sm:$0x1] %vm370, %v369
        %v372 = vld [vmem:[%s2] sm:$0x1]
        %v373 = vmul.f32 %v314, %v314
        %v374 = vmul.f32 %v315, %v315
        %v375 = vmul.f32 %v316, %v316
        %v376 = vmul.f32 %v317, %v317
        %v377 = vmul.f32 %v318, %v318
        %v378 = vmul.f32 %v319, %v319
        %v379 = vmul.f32 %v320, %v320
        %v380 = vmul.f32 %v321, %v321
        %v381 = vmul.f32 %v322, %v322
        %v382 = vmul.f32 %v323, %v323
        %v383 = vmul.f32 %v324, %v324
        %v384 = vmul.f32 %v325, %v325
        %v385 = vmul.f32 %v326, %v326
        %v386 = vmul.f32 %v327, %v327
        %v387 = vmul.f32 %v328, %v328
        %v388 = vmul.f32 %v329, %v329
        %v389 = vsel %vm331, %v373, 0.0
        %v390 = vsel %vm331, %v374, 0.0
        %v391 = vadd.f32 %v389, %v390
        %v392 = vsel %vm331, %v375, 0.0
        %v393 = vadd.f32 %v391, %v392
        %v394 = vsel %vm331, %v376, 0.0
        %v395 = vadd.f32 %v393, %v394
        %v396 = vsel %vm331, %v377, 0.0
        %v397 = vadd.f32 %v395, %v396
        %v398 = vsel %vm331, %v378, 0.0
        %v399 = vadd.f32 %v397, %v398
        %v400 = vsel %vm331, %v379, 0.0
        %v401 = vadd.f32 %v399, %v400
        %v402 = vsel %vm331, %v380, 0.0
        %v403 = vadd.f32 %v401, %v402
        %v404 = vsel %vm331, %v381, 0.0
        %v405 = vadd.f32 %v403, %v404
        %v406 = vsel %vm331, %v382, 0.0
        %v407 = vadd.f32 %v405, %v406
        %v408 = vsel %vm331, %v383, 0.0
        %v409 = vadd.f32 %v407, %v408
        %v410 = vsel %vm331, %v384, 0.0
        %v411 = vadd.f32 %v409, %v410
        %v412 = vsel %vm331, %v385, 0.0
        %v413 = vadd.f32 %v411, %v412
        %v414 = vsel %vm331, %v386, 0.0
        %v415 = vadd.f32 %v413, %v414
        %v416 = vsel %vm331, %v387, 0.0
        %v417 = vadd.f32 %v415, %v416
        %v418 = vsel %vm331, %v388, 0.0
        %v419 = vadd.f32 %v417, %v418
        %v420 = vrot.slane %v419, 4
        %v421 = vadd.f32 %v419, %v420
        %v422 = vrot.slane %v421, 2
        %v423 = vadd.f32 %v421, %v422
        %v424 = vrot.slane %v423, 1
        %v425 = vadd.f32 %v423, %v424
        %v426 = vadd.f32 %v372, %v425
        %427 = vst.msk [vmem:[%s2] sm:$0x1] %vm370, %v426
      $region36: #{mlp_forward.3} parent=23 // pred_fallthru
        _
      // Predicated region
      $region37: #{mlp_forward.3} parent=23 // pred_check
        %p428 = pneg %p53
      $region38: #{mlp_forward.3} parent=23 // pred_check_branch
        %430 = sbr.rel (%p428) target = $region40
      $region39: #{mlp_forward.3} parent=23 // pred_region
        _
      $region40: #{mlp_forward.3} parent=23 // pred_fallthru
        _
      // Predicated region
      $region41: #{mlp_forward.3} parent=23 // pred_check
        %p431 = pneg %p74
      $region42: #{mlp_forward.3} parent=23 // pred_check_branch
        %433 = sbr.rel (%p431) target = $region44
      $region43: #{mlp_forward.3} parent=23 // pred_region
        _
      $region44: #{mlp_forward.3} parent=23 // pred_fallthru
        _
      // Predicated region
      $region45: #{mlp_forward.3} parent=23 // pred_check
        %p434 = pneg %p53
      $region46: #{mlp_forward.3} parent=23 // pred_check_branch
        %436 = sbr.rel (%p434) target = $region48
      $region47: #{mlp_forward.3} parent=23 // pred_region
        _
      $region48: #{mlp_forward.3} parent=23 // pred_fallthru
        _
      // Predicated region
      $region49: #{mlp_forward.3} parent=23 // pred_check
        %p437 = pneg %p74
      $region50: #{mlp_forward.3} parent=23 // pred_check_branch
        %439 = sbr.rel (%p437) target = $region52
      $region51: #{mlp_forward.3} parent=23 // pred_region
        _
      $region52: #{mlp_forward.3} parent=23 // pred_fallthru
        _
    $region24: #{mlp_forward.3} parent=5 // pred_fallthru
      _
    %p440 = scmp.le.s32.totalorder 2, %s9
    // Predicated region
    $region53: #{mlp_forward.3} parent=5 // pred_check
      %p441 = pneg %p440
    $region54: #{mlp_forward.3} parent=5 // pred_check_branch
      %443 = sbr.rel (%p441) target = $region56
    $region55: #{mlp_forward.3} parent=5 // pred_region
      %s444 = ssub.s32 %s9, 2
    $region56: #{mlp_forward.3} parent=5 // pred_fallthru
      _
  $region6: #{mlp_forward.3} parent=0 // loop_footer
    %s13 = sadd.s32 1, %s9
  $region7: #{mlp_forward.3} parent=0 // loop_footer_branch
    %8 = sbr.rel target = $region3
  $region8: #{mlp_forward.3} parent=0 // loop_exit
    _

// kernel: mlp_forward.5
$region0: #{mlp_forward.5}
  #allocation0 [shape = 'u32[]', space=smem, size = 0x4, offset = 0x4, fixed_abs, tag = 'smem constant byte address 0x4 - core index']
  #allocation1 [shape = 'u32[144,128]{1,0:T(1,128)}', space=vmem, size = 0x12000, scoped, tag = 'internal scratch']
  %s0 = inlined_call_operand.vmem [shape: bf16[200,64], index: 0, kind: input, shape index: {}]
  %s1 = inlined_call_operand.vmem [shape: f32[1,64], index: 1, kind: input, shape index: {}]
  %s2 = inlined_call_operand.vmem [shape: f32[1,64], index: 2, kind: input, shape index: {}]
  %s3 = inlined_call_operand.vmem [shape: bf16[64,16], index: 3, kind: input, shape index: {}]
  %s4 = inlined_call_operand.vmem [shape: f32[1,16], index: 4, kind: input, shape index: {}]
  %s5 = inlined_call_operand.vmem [shape: f32[200,16], index: 5, kind: output, shape index: {}]
  %s6 = sld [smem:[#allocation0]]
  $region101: #{mlp_forward.5} parent=0
    _
  %s8 = ssub.s32 1, %s6
  %s9 = scalar_select 0, %s8, %s6
  $region1: #{mlp_forward.5} parent=0
    #allocation2 [shape = 'u8[131072]{0}', space=vmem, size = 0x20000, scoped, tag = 'output window, operand 0']
    loop: start=0, step=1, limit=4
    $region2: #{mlp_forward.5} parent=1 // loop_pre_header
      _
    $region3: #{mlp_forward.5} parent=1 // loop_header
      %s11 = sphi 0, %s15
      %p12 = scmp.ge.s32.totalorder %s11, 4
      %s21 = sphi 0, %s23
      %s24 = sphi 0, %s21
      %s25 = sphi 0, %s24
      %s41 = sphi 0, %s25
      %s45 = sphi 0, %s45
      %s47 = sphi 0, %s45
      %s48 = sphi 0, %s47
      %s62 = sphi 0, %s48
      %s66 = sphi 0, %s66
      %s68 = sphi 0, %s66
      %s69 = sphi 0, %s68
      %s83 = sphi 0, %s69
      %s87 = sphi 0, %s87
      %s89 = sphi 0, %s87
      %s90 = sphi 0, %s89
      %s104 = sphi 0, %s90
      %s108 = sphi 0, %s108
      %s110 = sphi 0, %s108
      %s111 = sphi 0, %s110
      %s125 = sphi 0, %s111
      %s131 = sphi 0, %s133
      %s134 = sphi 0, %s131
      %s135 = sphi 0, %s134
      %s151 = sphi 0, %s135
    $region4: #{mlp_forward.5} parent=1 // loop_header_branch
      %14 = sbr.rel (%p12) target = $region8
    $region5: #{mlp_forward.5} parent=1 // loop_body
      %s16 = ssub.s32 %s11, 1
      %s17 = ssub.s32 %s11, 2
      %s18 = sadd.s32 %s11, 1
      %s19 = ssub.s32 %s11, %s18
      %p20 = scmp.eq.s32.totalorder %s19, 0
      %s22 = sadd.s32 %s21, 1
      %s23 = scalar_select %p20, %s21, %s22
      %p26 = pneg %p20
      %p27 = scmp.eq.s32.totalorder %s11, 1
      %p28 = por %p26, %p27
      %p29 = scmp.ne.s32.totalorder %s21, %s24
      %p30 = scmp.eq.s32.totalorder %s11, 0
      %p31 = por %p29, %p30
      %p32 = scmp.ne.s32.totalorder %s21, %s24
      %p33 = scmp.eq.s32.totalorder %s16, 1
      %p34 = por %p32, %p33
      %p35 = scmp.ne.s32.totalorder %s24, %s25
      %p36 = scmp.eq.s32.totalorder %s16, 0
      %p37 = por %p35, %p36
      %p38 = scmp.ne.s32.totalorder %s24, %s25
      %p39 = scmp.eq.s32.totalorder %s17, 1
      %p40 = por %p38, %p39
      %p42 = scmp.ne.s32.totalorder %s25, %s41
      %p43 = scmp.eq.s32.totalorder %s17, 0
      %p44 = por %p42, %p43
      %s46 = sadd.s32 %s45, 1
      %p49 = scmp.eq.s32.totalorder %s11, 1
      %p50 = scmp.ne.s32.totalorder %s45, %s47
      %p51 = scmp.eq.s32.totalorder %s11, 0
      %p52 = por %p50, %p51
      %p53 = scmp.ne.s32.totalorder %s45, %s47
      %p54 = scmp.eq.s32.totalorder %s16, 1
      %p55 = por %p53, %p54
      %p56 = scmp.ne.s32.totalorder %s47, %s48
      %p57 = scmp.eq.s32.totalorder %s16, 0
      %p58 = por %p56, %p57
      %p59 = scmp.ne.s32.totalorder %s47, %s48
      %p60 = scmp.eq.s32.totalorder %s17, 1
      %p61 = por %p59, %p60
      %p63 = scmp.ne.s32.totalorder %s48, %s62
      %p64 = scmp.eq.s32.totalorder %s17, 0
      %p65 = por %p63, %p64
      %s67 = sadd.s32 %s66, 1
      %p70 = scmp.eq.s32.totalorder %s11, 1
      %p71 = scmp.ne.s32.totalorder %s66, %s68
      %p72 = scmp.eq.s32.totalorder %s11, 0
      %p73 = por %p71, %p72
      %p74 = scmp.ne.s32.totalorder %s66, %s68
      %p75 = scmp.eq.s32.totalorder %s16, 1
      %p76 = por %p74, %p75
      %p77 = scmp.ne.s32.totalorder %s68, %s69
      %p78 = scmp.eq.s32.totalorder %s16, 0
      %p79 = por %p77, %p78
      %p80 = scmp.ne.s32.totalorder %s68, %s69
      %p81 = scmp.eq.s32.totalorder %s17, 1
      %p82 = por %p80, %p81
      %p84 = scmp.ne.s32.totalorder %s69, %s83
      %p85 = scmp.eq.s32.totalorder %s17, 0
      %p86 = por %p84, %p85
      %s88 = sadd.s32 %s87, 1
      %p91 = scmp.eq.s32.totalorder %s11, 1
      %p92 = scmp.ne.s32.totalorder %s87, %s89
      %p93 = scmp.eq.s32.totalorder %s11, 0
      %p94 = por %p92, %p93
      %p95 = scmp.ne.s32.totalorder %s87, %s89
      %p96 = scmp.eq.s32.totalorder %s16, 1
      %p97 = por %p95, %p96
      %p98 = scmp.ne.s32.totalorder %s89, %s90
      %p99 = scmp.eq.s32.totalorder %s16, 0
      %p100 = por %p98, %p99
      %p101 = scmp.ne.s32.totalorder %s89, %s90
      %p102 = scmp.eq.s32.totalorder %s17, 1
      %p103 = por %p101, %p102
      %p105 = scmp.ne.s32.totalorder %s90, %s104
      %p106 = scmp.eq.s32.totalorder %s17, 0
      %p107 = por %p105, %p106
      %s109 = sadd.s32 %s108, 1
      %p112 = scmp.eq.s32.totalorder %s11, 1
      %p113 = scmp.ne.s32.totalorder %s108, %s110
      %p114 = scmp.eq.s32.totalorder %s11, 0
      %p115 = por %p113, %p114
      %p116 = scmp.ne.s32.totalorder %s108, %s110
      %p117 = scmp.eq.s32.totalorder %s16, 1
      %p118 = por %p116, %p117
      %p119 = scmp.ne.s32.totalorder %s110, %s111
      %p120 = scmp.eq.s32.totalorder %s16, 0
      %p121 = por %p119, %p120
      %p122 = scmp.ne.s32.totalorder %s110, %s111
      %p123 = scmp.eq.s32.totalorder %s17, 1
      %p124 = por %p122, %p123
      %p126 = scmp.ne.s32.totalorder %s111, %s125
      %p127 = scmp.eq.s32.totalorder %s17, 0
      %p128 = por %p126, %p127
      %s129 = ssub.s32 %s11, %s18
      %p130 = scmp.eq.s32.totalorder %s129, 0
      %s132 = sadd.s32 %s131, 1
      %s133 = scalar_select %p130, %s131, %s132
      %p136 = pneg %p130
      %p137 = scmp.eq.s32.totalorder %s11, 1
      %p138 = por %p136, %p137
      %p139 = scmp.ne.s32.totalorder %s131, %s134
      %p140 = scmp.eq.s32.totalorder %s11, 0
      %p141 = por %p139, %p140
      %p142 = scmp.ne.s32.totalorder %s131, %s134
      %p143 = scmp.eq.s32.totalorder %s16, 1
      %p144 = por %p142, %p143
      %p145 = scmp.ne.s32.totalorder %s134, %s135
      %p146 = scmp.eq.s32.totalorder %s16, 0
      %p147 = por %p145, %p146
      %p148 = scmp.ne.s32.totalorder %s134, %s135
      %p149 = scmp.eq.s32.totalorder %s17, 1
      %p150 = por %p148, %p149
      %p152 = scmp.ne.s32.totalorder %s135, %s151
      %p153 = scmp.eq.s32.totalorder %s17, 0
      %p154 = por %p152, %p153
      %p155 = scmp.le.s32.totalorder 1, %s11
      %p156 = scmp.lt.s32.totalorder %s11, 3
      %p157 = pnand %p155, %p156
      %p158 = pneg %p157
      // Predicated region
      $region9: #{mlp_forward.5} parent=5 // pred_check
        _
      $region10: #{mlp_forward.5} parent=5 // pred_check_branch
        %160 = sbr.rel (%p157) target = $region12
      $region11: #{mlp_forward.5} parent=5 // pred_region
        %s161 = ssub.s32 %s11, 1
        // Predicated region
        $region13: #{mlp_forward.5} parent=11 // pred_check
          %p162 = pneg %p58
        $region14: #{mlp_forward.5} parent=11 // pred_check_branch
          %164 = sbr.rel (%p162) target = $region16
        $region15: #{mlp_forward.5} parent=11 // pred_region
          _
        $region16: #{mlp_forward.5} parent=11 // pred_fallthru
          _
        // Predicated region
        $region17: #{mlp_forward.5} parent=11 // pred_check
          %p165 = pneg %p79
        $region18: #{mlp_forward.5} parent=11 // pred_check_branch
          %167 = sbr.rel (%p165) target = $region20
        $region19: #{mlp_forward.5} parent=11 // pred_region
          _
        $region20: #{mlp_forward.5} parent=11 // pred_fallthru
          _
        // Predicated region
        $region21: #{mlp_forward.5} parent=11 // pred_check
          %p168 = pneg %p100
        $region22: #{mlp_forward.5} parent=11 // pred_check_branch
          %170 = sbr.rel (%p168) target = $region24
        $region23: #{mlp_forward.5} parent=11 // pred_region
          _
        $region24: #{mlp_forward.5} parent=11 // pred_fallthru
          _
        // Predicated region
        $region25: #{mlp_forward.5} parent=11 // pred_check
          %p171 = pneg %p121
        $region26: #{mlp_forward.5} parent=11 // pred_check_branch
          %173 = sbr.rel (%p171) target = $region28
        $region27: #{mlp_forward.5} parent=11 // pred_region
          _
        $region28: #{mlp_forward.5} parent=11 // pred_fallthru
          _
      $region12: #{mlp_forward.5} parent=5 // pred_fallthru
        _
      %p174 = scmp.lt.s32.totalorder %s11, 2
      // Predicated region
      $region29: #{mlp_forward.5} parent=5 // pred_check
        %p175 = pneg %p174
      $region30: #{mlp_forward.5} parent=5 // pred_check_branch
        %177 = sbr.rel (%p175) target = $region32
      $region31: #{mlp_forward.5} parent=5 // pred_region
        // Predicated region
        $region33: #{mlp_forward.5} parent=31 // pred_check
          %p178 = pneg %p31
        $region34: #{mlp_forward.5} parent=31 // pred_check_branch
          %180 = sbr.rel (%p178) target = $region36
        $region35: #{mlp_forward.5} parent=31 // pred_region
          %s181 = smul.u32 16, %s11
          %s182 = ssub.s32 25, %s181
          %p183 = scmp.lt.s32.totalorder %s182, 16
          %s184 = scalar_select %p183, %s182, 16
          %s185 = smul.u32 64, %s184
          %p186 = scmp.lt.s32.totalorder %s181, 24
          %s187 = scalar_select %p186, %s181, 24
          %s188 = smul.addr %s187, 4
          %s189 = scalar_lea.vmem %s0, %s188
          %s190 = smul.u32 16, %s11
          %s191 = ssub.s32 25, %s190
          %p192 = scmp.lt.s32.totalorder %s191, 16
          %s193 = scalar_select %p192, %s191, 16
          %s194 = smul.u32 64, %s193
        $region36: #{mlp_forward.5} parent=31 // pred_fallthru
          _
      $region32: #{mlp_forward.5} parent=5 // pred_fallthru
        _
      %p195 = scmp.le.s32.totalorder 1, %s11
      %p196 = scmp.lt.s32.totalorder %s11, 3
      %p197 = pnand %p195, %p196
      %p198 = pneg %p197
      // Predicated region
      $region37: #{mlp_forward.5} parent=5 // pred_check
        _
      $region38: #{mlp_forward.5} parent=5 // pred_check_branch
        %200 = sbr.rel (%p197) target = $region40
      $region39: #{mlp_forward.5} parent=5 // pred_region
        %s201 = ssub.s32 %s11, 1
        %s202 = smul.u32 16, %s16
        %s203 = ssub.s32 25, %s202
        %p204 = scmp.lt.s32.totalorder %s203, 16
        %s205 = scalar_select %p204, %s203, 16
        %s206 = smul.u32 64, %s205
        %p207 = scmp.lt.s32.totalorder %s202, 24
        %s208 = scalar_select %p207, %s202, 24
        %s209 = smul.addr %s208, 4
        %s210 = scalar_lea.vmem %s0, %s209
        %p211 = pneg %p37
        %p212 = pneg %p34
        %p213 = pneg %p58
        %p214 = pneg %p55
        %p215 = pneg %p79
        %p216 = pneg %p76
        %p217 = pneg %p100
        %p218 = pneg %p97
        %p219 = pneg %p121
        %p220 = pneg %p118
        %p221 = pneg %p147
        %p222 = pneg %p144
        %s223 = sand.u32 %s134, 1
        %s224 = sand.u32 %s134, 1
        %s225 = smul.addr %s224, 128
        %s226 = scalar_lea.vmem [#allocation2], %s225
        %s227 = smul.u32 16, %s16
        %s228 = ssub.s32 25, %s227
        %p229 = scmp.lt.s32.totalorder %s228, 16
        %s230 = scalar_select %p229, %s228, 16
        %s231 = smul.u32 64, %s230
        %p232 = scmp.lt.s32.totalorder %s227, 24
        %s233 = scalar_select %p232, %s227, 24
        %s234 = smul.addr %s233, 4
        %s235 = scalar_lea.vmem %s0, %s234
        %s236 = smul.u32 16, %s16
        %s237 = ssub.s32 25, %s236
        %p238 = scmp.lt.s32.totalorder %s237, 16
        %s239 = scalar_select %p238, %s237, 16
        %s240 = smul.u32 64, %s239
        %s241 = smul.u32 16, %s16
        %s242 = ssub.s32 25, %s241
        %p243 = scmp.lt.s32.totalorder %s242, 16
        %s244 = scalar_select %p243, %s242, 16
        %s245 = smul.u32 128, %s244
        %v247 = vld [vmem:[%s235] sm:$0xf]
        %v248 = vld [vmem:[%s235 + $0x4] sm:$0xf]
        %v249 = vld [vmem:[%s235 + $0x8] sm:$0xf]
        %v250 = vld [vmem:[%s235 + $0xc] sm:$0xf]
        %v251 = vld [vmem:[%s235 + $0x10] sm:$0xf]
        %v252 = vld [vmem:[%s235 + $0x14] sm:$0xf]
        %v253 = vld [vmem:[%s235 + $0x18] sm:$0xf]
        %v254 = vld [vmem:[%s235 + $0x1c] sm:$0xf]
        %v255 = vld [vmem:[%s235 + $0x20] sm:$0xf]
        %v256 = vld [vmem:[%s235 + $0x24] sm:$0xf]
        %v257 = vld [vmem:[%s235 + $0x28] sm:$0xf]
        %v258 = vld [vmem:[%s235 + $0x2c] sm:$0xf]
        %v259 = vld [vmem:[%s235 + $0x30] sm:$0xf]
        %v260 = vld [vmem:[%s235 + $0x34] sm:$0xf]
        %v261 = vld [vmem:[%s235 + $0x38] sm:$0xf]
        %v262 = vld [vmem:[%s235 + $0x3c] sm:$0xf]
        %v263 = vunpack.c.l.bf16 %v247
        %v264 = vunpack.c.l.bf16 %v248
        %v265 = vunpack.c.l.bf16 %v249
        %v266 = vunpack.c.l.bf16 %v250
        %v267 = vunpack.c.l.bf16 %v251
        %v268 = vunpack.c.l.bf16 %v252
        %v269 = vunpack.c.l.bf16 %v253
        %v270 = vunpack.c.l.bf16 %v254
        %v271 = vunpack.c.l.bf16 %v255
        %v272 = vunpack.c.l.bf16 %v256
        %v273 = vunpack.c.l.bf16 %v257
        %v274 = vunpack.c.l.bf16 %v258
        %v275 = vunpack.c.l.bf16 %v259
        %v276 = vunpack.c.l.bf16 %v260
        %v277 = vunpack.c.l.bf16 %v261
        %v278 = vunpack.c.l.bf16 %v262
        %v279 = vld [vmem:[%s1] sm:$0x1]
        %v281 = vlaneseq
        %v282 = vshrl.u32 %v281, 7
        %v283 = vsub.s32 0, %v282
        %v284 = vrot.slane %v279, %v283
        %v286 = vmul.f32 %v263, %v284
        %v287 = vmul.f32 %v264, %v284
        %v288 = vmul.f32 %v265, %v284
        %v289 = vmul.f32 %v266, %v284
        %v290 = vmul.f32 %v267, %v284
        %v291 = vmul.f32 %v268, %v284
        %v292 = vmul.f32 %v269, %v284
        %v293 = vmul.f32 %v270, %v284
        %v294 = vmul.f32 %v271, %v284
        %v295 = vmul.f32 %v272, %v284
        %v296 = vmul.f32 %v273, %v284
        %v297 = vmul.f32 %v274, %v284
        %v298 = vmul.f32 %v275, %v284
        %v299 = vmul.f32 %v276, %v284
        %v300 = vmul.f32 %v277, %v284
        %v301 = vmul.f32 %v278, %v284
        %v302 = vld [vmem:[%s2] sm:$0x1]
        %v304 = vlaneseq
        %v305 = vshrl.u32 %v304, 7
        %v306 = vsub.s32 0, %v305
        %v307 = vrot.slane %v302, %v306
        %v309 = vadd.f32 %v286, %v307
        %v310 = vadd.f32 %v287, %v307
        %v311 = vadd.f32 %v288, %v307
        %v312 = vadd.f32 %v289, %v307
        %v313 = vadd.f32 %v290, %v307
        %v314 = vadd.f32 %v291, %v307
        %v315 = vadd.f32 %v292, %v307
        %v316 = vadd.f32 %v293, %v307
        %v317 = vadd.f32 %v294, %v307
        %v318 = vadd.f32 %v295, %v307
        %v319 = vadd.f32 %v296, %v307
        %v320 = vadd.f32 %v297, %v307
        %v321 = vadd.f32 %v298, %v307
        %v322 = vadd.f32 %v299, %v307
        %v323 = vadd.f32 %v300, %v307
        %v324 = vadd.f32 %v301, %v307
        %vm325 = vcmp.ge.f32.partialorder %v309, 0.0
        %vm326 = vcmp.ge.f32.partialorder %v310, 0.0
        %vm327 = vcmp.ge.f32.partialorder %v311, 0.0
        %vm328 = vcmp.ge.f32.partialorder %v312, 0.0
        %vm329 = vcmp.ge.f32.partialorder %v313, 0.0
        %vm330 = vcmp.ge.f32.partialorder %v314, 0.0
        %vm331 = vcmp.ge.f32.partialorder %v315, 0.0
        %vm332 = vcmp.ge.f32.partialorder %v316, 0.0
        %vm333 = vcmp.ge.f32.partialorder %v317, 0.0
        %vm334 = vcmp.ge.f32.partialorder %v318, 0.0
        %vm335 = vcmp.ge.f32.partialorder %v319, 0.0
        %vm336 = vcmp.ge.f32.partialorder %v320, 0.0
        %vm337 = vcmp.ge.f32.partialorder %v321, 0.0
        %vm338 = vcmp.ge.f32.partialorder %v322, 0.0
        %vm339 = vcmp.ge.f32.partialorder %v323, 0.0
        %vm340 = vcmp.ge.f32.partialorder %v324, 0.0
        %v341 = vmul.f32 %v309, 0.2
        %v342 = vmul.f32 %v310, 0.2
        %v343 = vmul.f32 %v311, 0.2
        %v344 = vmul.f32 %v312, 0.2
        %v345 = vmul.f32 %v313, 0.2
        %v346 = vmul.f32 %v314, 0.2
        %v347 = vmul.f32 %v315, 0.2
        %v348 = vmul.f32 %v316, 0.2
        %v349 = vmul.f32 %v317, 0.2
        %v350 = vmul.f32 %v318, 0.2
        %v351 = vmul.f32 %v319, 0.2
        %v352 = vmul.f32 %v320, 0.2
        %v353 = vmul.f32 %v321, 0.2
        %v354 = vmul.f32 %v322, 0.2
        %v355 = vmul.f32 %v323, 0.2
        %v356 = vmul.f32 %v324, 0.2
        %v357 = vsel %vm325, %v309, %v341
        %v358 = vsel %vm326, %v310, %v342
        %v359 = vsel %vm327, %v311, %v343
        %v360 = vsel %vm328, %v312, %v344
        %v361 = vsel %vm329, %v313, %v345
        %v362 = vsel %vm330, %v314, %v346
        %v363 = vsel %vm331, %v315, %v347
        %v364 = vsel %vm332, %v316, %v348
        %v365 = vsel %vm333, %v317, %v349
        %v366 = vsel %vm334, %v318, %v350
        %v367 = vsel %vm335, %v319, %v351
        %v368 = vsel %vm336, %v320, %v352
        %v369 = vsel %vm337, %v321, %v353
        %v370 = vsel %vm338, %v322, %v354
        %v371 = vsel %vm339, %v323, %v355
        %v372 = vsel %vm340, %v324, %v356
        %v373 = vpack.c.bf16 %v358, %v357
        %v374 = vpack.c.bf16 %v360, %v359
        %v375 = vpack.c.bf16 %v362, %v361
        %v376 = vpack.c.bf16 %v364, %v363
        %v377 = vpack.c.bf16 %v366, %v365
        %v378 = vpack.c.bf16 %v368, %v367
        %v379 = vpack.c.bf16 %v370, %v369
        %v380 = vpack.c.bf16 %v372, %v371
        %v381 = vld [vmem:[%s3] sm:$0xf]
        %v382 = vld [vmem:[%s3 + $0x4] sm:$0xf]
        %v383 = vld [vmem:[%s3 + $0x8] sm:$0xf]
        %v384 = vld [vmem:[%s3 + $0xc] sm:$0xf]
        %v385 = vld [vmem:[%s3 + $0x10] sm:$0xf]
        %v386 = vld [vmem:[%s3 + $0x14] sm:$0xf]
        %v387 = vld [vmem:[%s3 + $0x18] sm:$0xf]
        %v388 = vld [vmem:[%s3 + $0x1c] sm:$0xf]
        %v389 = vld [vmem:[%s4] sm:$0x1]
        %v391 = vlaneseq
        %v392 = vshrl.u32 %v391, 7
        %v393 = vsub.s32 0, %v392
        %v394 = vrot.slane %v389, %v393
        %v404 = vunpack.c.l.b16 %v381
        %v405 = vunpack.c.l.b16 %v382
        %v406 = vunpack.c.l.b16 %v383
        %v407 = vunpack.c.l.b16 %v384
        %v408 = vunpack.c.l.b16 %v385
        %v409 = vunpack.c.l.b16 %v386
        %v410 = vunpack.c.l.b16 %v387
        %v411 = vunpack.c.l.b16 %v388
        %v412 = vpack.c.b16 %v405, %v404
        %v413 = vpack.c.b16 %v407, %v406
        %v414 = vpack.c.b16 %v409, %v408
        %v415 = vpack.c.b16 %v411, %v410
        %vm420 = vcmask 523264
        %v422 = vsel %vm420, %v373, 0
        %v425 = vsel %vm420, %v374, 0
        %v428 = vsel %vm420, %v375, 0
        %v431 = vsel %vm420, %v376, 0
        %v434 = vsel %vm420, %v377, 0
        %v437 = vsel %vm420, %v378, 0
        %v440 = vsel %vm420, %v379, 0
        %v443 = vsel %vm420, %v380, 0
        %445 = vmatprep.subr.bf16.mxu0 0
        %446 = vmatpush1.bf16.msra.mxu0 0
        %447 = vmatprep.subr.bf16.mxu0 0
        %448 = vmatpush1.bf16.msra.mxu0 0
        %449 = vmatprep.subr.bf16.mxu0 0
        %450 = vmatpush1.bf16.msra.mxu0 0
        %451 = vmatprep.subr.bf16.mxu0 0
        %452 = vmatpush1.bf16.msra.mxu0 0
        %453 = vmatprep.subr.bf16.mxu0 0
        %454 = vmatpush1.bf16.msra.mxu0 %v415
        %455 = vmatprep.subr.bf16.mxu0 0
        %456 = vmatpush1.bf16.msra.mxu0 %v414
        %457 = vmatprep.subr.bf16.mxu0 0
        %458 = vmatpush1.bf16.msra.mxu0 %v413
        %459 = vmatprep.subr.bf16.mxu0 0
        %460 = vmatpush1.bf16.msra.mxu0 %v412
        %461 = vmatprep.subr.bf16.mxu0 0
        %462 = vmatpush2.bf16.msra.mxu0 0
        %463 = vmatprep.subr.bf16.mxu0 0
        %464 = vmatpush2.bf16.msra.mxu0 0
        %465 = vmatprep.subr.bf16.mxu0 0
        %466 = vmatpush2.bf16.msra.mxu0 0
        %467 = vmatprep.subr.bf16.mxu0 0
        %468 = vmatpush2.bf16.msra.mxu0 0
        %469 = vmatprep.subr.bf16.mxu0 0
        %470 = vmatpush2.bf16.msra.mxu0 0
        %471 = vmatprep.subr.bf16.mxu0 0
        %472 = vmatpush2.bf16.msra.mxu0 0
        %473 = vmatprep.subr.bf16.mxu0 0
        %474 = vmatpush2.bf16.msra.mxu0 0
        %475 = vmatprep.subr.bf16.mxu0 0
        %476 = vmatpush2.bf16.msra.mxu0 0
        %477 = vmatprep.mubr.bf16.mxu0 0
        %478 = vmatmul.mubr.bf16.gmra.mxu0 %v422
        %v479 = vpop.f32.mrf.mxu0
        %v480 = vadd.f32 %v394, %v479
        %v481 = vpop.f32.mrf.mxu0
        %v482 = vpop.f32.mrf.mxu0
        %v483 = vadd.f32 %v394, %v482
        %v484 = vpop.f32.mrf.mxu0
        %485 = vmatprep.mubr.bf16.mxu0 0
        %486 = vmatmul.mubr.bf16.gmra.mxu0 %v425
        %v487 = vpop.f32.mrf.mxu0
        %v488 = vadd.f32 %v394, %v487
        %v489 = vpop.f32.mrf.mxu0
        %v490 = vpop.f32.mrf.mxu0
        %v491 = vadd.f32 %v394, %v490
        %v492 = vpop.f32.mrf.mxu0
        %493 = vmatprep.mubr.bf16.mxu0 0
        %494 = vmatmul.mubr.bf16.gmra.mxu0 %v428
        %v495 = vpop.f32.mrf.mxu0
        %v496 = vadd.f32 %v394, %v495
        %v497 = vpop.f32.mrf.mxu0
        %v498 = vpop.f32.mrf.mxu0
        %v499 = vadd.f32 %v394, %v498
        %v500 = vpop.f32.mrf.mxu0
        %501 = vmatprep.mubr.bf16.mxu0 0
        %502 = vmatmul.mubr.bf16.gmra.mxu0 %v431
        %v503 = vpop.f32.mrf.mxu0
        %v504 = vadd.f32 %v394, %v503
        %v505 = vpop.f32.mrf.mxu0
        %v506 = vpop.f32.mrf.mxu0
        %v507 = vadd.f32 %v394, %v506
        %v508 = vpop.f32.mrf.mxu0
        %509 = vmatprep.mubr.bf16.mxu0 0
        %510 = vmatmul.mubr.bf16.gmra.mxu0 %v434
        %v511 = vpop.f32.mrf.mxu0
        %v512 = vadd.f32 %v394, %v511
        %v513 = vpop.f32.mrf.mxu0
        %v514 = vpop.f32.mrf.mxu0
        %v515 = vadd.f32 %v394, %v514
        %v516 = vpop.f32.mrf.mxu0
        %517 = vmatprep.mubr.bf16.mxu0 0
        %518 = vmatmul.mubr.bf16.gmra.mxu0 %v437
        %v519 = vpop.f32.mrf.mxu0
        %v520 = vadd.f32 %v394, %v519
        %v521 = vpop.f32.mrf.mxu0
        %v522 = vpop.f32.mrf.mxu0
        %v523 = vadd.f32 %v394, %v522
        %v524 = vpop.f32.mrf.mxu0
        %525 = vmatprep.mubr.bf16.mxu0 0
        %526 = vmatmul.mubr.bf16.gmra.mxu0 %v440
        %v527 = vpop.f32.mrf.mxu0
        %v528 = vadd.f32 %v394, %v527
        %v529 = vpop.f32.mrf.mxu0
        %v530 = vpop.f32.mrf.mxu0
        %v531 = vadd.f32 %v394, %v530
        %v532 = vpop.f32.mrf.mxu0
        %533 = vmatprep.mubr.bf16.mxu0 0
        %534 = vmatmul.mubr.bf16.gmra.mxu0 %v443
        %v535 = vpop.f32.mrf.mxu0
        %v536 = vadd.f32 %v394, %v535
        %v537 = vpop.f32.mrf.mxu0
        %v538 = vpop.f32.mrf.mxu0
        %v539 = vadd.f32 %v394, %v538
        %v540 = vpop.f32.mrf.mxu0
        %541 = vdwg.mxu0
        %vm542 = vcmask 130048
        %543 = vst.msk [vmem:[%s226] sm:$0xff] %vm542, %v480
        %544 = vst.msk [vmem:[%s226 + $0x8] sm:$0xff] %vm542, %v483
        %545 = vst.msk [vmem:[%s226 + $0x10] sm:$0xff] %vm542, %v488
        %546 = vst.msk [vmem:[%s226 + $0x18] sm:$0xff] %vm542, %v491
        %547 = vst.msk [vmem:[%s226 + $0x20] sm:$0xff] %vm542, %v496
        %548 = vst.msk [vmem:[%s226 + $0x28] sm:$0xff] %vm542, %v499
        %549 = vst.msk [vmem:[%s226 + $0x30] sm:$0xff] %vm542, %v504
        %550 = vst.msk [vmem:[%s226 + $0x38] sm:$0xff] %vm542, %v507
        %551 = vst.msk [vmem:[%s226 + $0x40] sm:$0xff] %vm542, %v512
        %552 = vst.msk [vmem:[%s226 + $0x48] sm:$0xff] %vm542, %v515
        %553 = vst.msk [vmem:[%s226 + $0x50] sm:$0xff] %vm542, %v520
        %554 = vst.msk [vmem:[%s226 + $0x58] sm:$0xff] %vm542, %v523
        %555 = vst.msk [vmem:[%s226 + $0x60] sm:$0xff] %vm542, %v528
        %556 = vst.msk [vmem:[%s226 + $0x68] sm:$0xff] %vm542, %v531
        %557 = vst.msk [vmem:[%s226 + $0x70] sm:$0xff] %vm542, %v536
        %558 = vst.msk [vmem:[%s226 + $0x78] sm:$0xff] %vm542, %v539
        %s559 = sand.u32 %s134, 1
        %s560 = sand.u32 %s134, 1
        %s561 = smul.addr %s560, 128
        %s562 = scalar_lea.vmem [#allocation2], %s561
        // Predicated region
        $region41: #{mlp_forward.5} parent=39 // pred_check
          %p563 = pneg %p144
        $region42: #{mlp_forward.5} parent=39 // pred_check_branch
          %565 = sbr.rel (%p563) target = $region44
        $region43: #{mlp_forward.5} parent=39 // pred_region
          %s566 = smul.u32 16, %s16
          %s567 = ssub.s32 25, %s566
          %p568 = scmp.lt.s32.totalorder %s567, 16
          %s569 = scalar_select %p568, %s567, 16
          %s570 = smul.u32 128, %s569
          %p571 = scmp.ne.s32.totalorder 0, %s570
          %s572 = smul.addr %s566, 8
          %s573 = scalar_lea.vmem %s5, %s572
          // Predicated region
          $region45: #{mlp_forward.5} parent=43 // pred_check
            %p574 = pneg %p571
          $region46: #{mlp_forward.5} parent=43 // pred_check_branch
            %576 = sbr.rel (%p574) target = $region48
          $region47: #{mlp_forward.5} parent=43 // pred_region
            // Predicated region
            $region49: #{mlp_forward.5} parent=47 // pred_check
              _
            $region50: #{mlp_forward.5} parent=47 // pred_check_branch
              %578 = sbr.rel (0) target = $region52
            $region51: #{mlp_forward.5} parent=47 // pred_region
              // Predicated region
              $region71: #{mlp_forward.5} parent=51 // pred_check
                _
              $region72: #{mlp_forward.5} parent=51 // pred_check_branch
                %658 = sbr.rel (0) target = $region74
              $region73: #{mlp_forward.5} parent=51 // pred_region
                %s659 = sshrl.u32 %s569, 4
                // While loop
                $region75: #{mlp_forward.5} parent=73 // loop_pre_header
                  _
                $region76: #{mlp_forward.5} parent=73 // loop_header
                  %s661 = sphi 0, %s663
                  %p662 = scmp.ge.s32.totalorder %s661, %s659
                  %s666 = sphi 0, %s703
                  %s667 = sphi %s562, %s706
                  %s668 = sphi %s573, %s707
                $region77: #{mlp_forward.5} parent=73 // loop_header_branch
                  %665 = sbr.rel (%p662) target = $region81
                $region78: #{mlp_forward.5} parent=73 // loop_body
                  %v669 = vld [vmem:[%s667] sm:$0xff]
                  %670 = vst [vmem:[%s668] sm:$0xff] %v669
                  %v671 = vld [vmem:[%s667 + $0x8] sm:$0xff]
                  %672 = vst [vmem:[%s668 + $0x8] sm:$0xff] %v671
                  %v673 = vld [vmem:[%s667 + $0x10] sm:$0xff]
                  %674 = vst [vmem:[%s668 + $0x10] sm:$0xff] %v673
                  %v675 = vld [vmem:[%s667 + $0x18] sm:$0xff]
                  %676 = vst [vmem:[%s668 + $0x18] sm:$0xff] %v675
                  %v677 = vld [vmem:[%s667 + $0x20] sm:$0xff]
                  %678 = vst [vmem:[%s668 + $0x20] sm:$0xff] %v677
                  %v679 = vld [vmem:[%s667 + $0x28] sm:$0xff]
                  %680 = vst [vmem:[%s668 + $0x28] sm:$0xff] %v679
                  %v681 = vld [vmem:[%s667 + $0x30] sm:$0xff]
                  %682 = vst [vmem:[%s668 + $0x30] sm:$0xff] %v681
                  %v683 = vld [vmem:[%s667 + $0x38] sm:$0xff]
                  %684 = vst [vmem:[%s668 + $0x38] sm:$0xff] %v683
                  %v685 = vld [vmem:[%s667 + $0x40] sm:$0xff]
                  %686 = vst [vmem:[%s668 + $0x40] sm:$0xff] %v685
                  %v687 = vld [vmem:[%s667 + $0x48] sm:$0xff]
                  %688 = vst [vmem:[%s668 + $0x48] sm:$0xff] %v687
                  %v689 = vld [vmem:[%s667 + $0x50] sm:$0xff]
                  %690 = vst [vmem:[%s668 + $0x50] sm:$0xff] %v689
                  %v691 = vld [vmem:[%s667 + $0x58] sm:$0xff]
                  %692 = vst [vmem:[%s668 + $0x58] sm:$0xff] %v691
                  %v693 = vld [vmem:[%s667 + $0x60] sm:$0xff]
                  %694 = vst [vmem:[%s668 + $0x60] sm:$0xff] %v693
                  %v695 = vld [vmem:[%s667 + $0x68] sm:$0xff]
                  %696 = vst [vmem:[%s668 + $0x68] sm:$0xff] %v695
                  %v697 = vld [vmem:[%s667 + $0x70] sm:$0xff]
                  %698 = vst [vmem:[%s668 + $0x70] sm:$0xff] %v697
                  %v699 = vld [vmem:[%s667 + $0x78] sm:$0xff]
                  %700 = vst [vmem:[%s668 + $0x78] sm:$0xff] %v699
                  %s701 = sadd.s32 1, %s666
                  %p702 = scmp.ge.s32.totalorder %s701, %s659
                  %s703 = scalar_select %p702, 0, %s701
                  %s704 = smul.u32 %s703, 128
                  %s705 = smul.u32 %s703, 128
                  %s706 = scalar_lea.vmem %s562, %s704 [#allocation2]
                  %s707 = scalar_lea.vmem %s573, %s705
                $region79: #{mlp_forward.5} parent=73 // loop_footer
                  %s663 = sadd.s32 %s661, 1
                $region80: #{mlp_forward.5} parent=73 // loop_footer_branch
                  %660 = sbr.rel target = $region76
                $region81: #{mlp_forward.5} parent=73 // loop_exit
                  _
                %s708 = sshrl.u32 %s569, 4
                %s709 = sand.u32 %s569, 15
                %s710 = smul.u32 %s708, 16
                %s711 = smul.u32 8, %s710
                %s712 = scalar_lea.vmem %s562, %s711 [#allocation2]
                %s713 = smul.u32 8, %s710
                %s714 = scalar_lea.vmem %s573, %s713
                // While loop
                $region82: #{mlp_forward.5} parent=73 // loop_pre_header
                  _
                $region83: #{mlp_forward.5} parent=73 // loop_header
                  %s716 = sphi 0, %s718
                  %p717 = scmp.ge.s32.totalorder %s716, %s709
                  %s721 = sphi 0, %s728
                  %s722 = sphi %s712, %s731
                  %s723 = sphi %s714, %s732
                $region84: #{mlp_forward.5} parent=73 // loop_header_branch
                  %720 = sbr.rel (%p717) target = $region88
                $region85: #{mlp_forward.5} parent=73 // loop_body
                  %v724 = vld [vmem:[%s722] sm:$0xff]
                  %725 = vst [vmem:[%s723] sm:$0xff] %v724
                  %s726 = sadd.s32 1, %s721
                  %p727 = scmp.ge.s32.totalorder %s726, %s709
                  %s728 = scalar_select %p727, 0, %s726
                  %s729 = smul.u32 %s728, 8
                  %s730 = smul.u32 %s728, 8
                  %s731 = scalar_lea.vmem %s712, %s729 [#allocation2]
                  %s732 = scalar_lea.vmem %s714, %s730
                $region86: #{mlp_forward.5} parent=73 // loop_footer
                  %s718 = sadd.s32 %s716, 1
                $region87: #{mlp_forward.5} parent=73 // loop_footer_branch
                  %715 = sbr.rel target = $region83
                $region88: #{mlp_forward.5} parent=73 // loop_exit
                  _
              $region74: #{mlp_forward.5} parent=51 // pred_fallthru
                _
              // Predicated region
              $region89: #{mlp_forward.5} parent=51 // pred_check
                _
              $region90: #{mlp_forward.5} parent=51 // pred_check_branch
                %734 = sbr.rel target = $region92
              $region91: #{mlp_forward.5} parent=51 // pred_region
                _
              $region92: #{mlp_forward.5} parent=51 // pred_fallthru
                _
            $region52: #{mlp_forward.5} parent=47 // pred_fallthru
              _
            // Predicated region
            $region53: #{mlp_forward.5} parent=47 // pred_check
              _
            $region54: #{mlp_forward.5} parent=47 // pred_check_branch
              %580 = sbr.rel target = $region56
            $region55: #{mlp_forward.5} parent=47 // pred_region
              %s582 = ssub.s32 256, 1
              %s583 = sshrl.u32 %s569, 4
              // While loop
              $region57: #{mlp_forward.5} parent=55 // loop_pre_header
                _
              $region58: #{mlp_forward.5} parent=55 // loop_header
                %s585 = sphi 0, %s587
                %p586 = scmp.ge.s32.totalorder %s585, %s583
                %s590 = sphi 0, %s627
                %s591 = sphi %s562, %s630
                %s592 = sphi %s573, %s631
              $region59: #{mlp_forward.5} parent=55 // loop_header_branch
                %589 = sbr.rel (%p586) target = $region63
              $region60: #{mlp_forward.5} parent=55 // loop_body
                %v593 = vld [vmem:[%s591] sm:%s582]
                %594 = vst [vmem:[%s592] sm:%s582] %v593
                %v595 = vld [vmem:[%s591 + $0x8] sm:%s582]
                %596 = vst [vmem:[%s592 + $0x8] sm:%s582] %v595
                %v597 = vld [vmem:[%s591 + $0x10] sm:%s582]
                %598 = vst [vmem:[%s592 + $0x10] sm:%s582] %v597
                %v599 = vld [vmem:[%s591 + $0x18] sm:%s582]
                %600 = vst [vmem:[%s592 + $0x18] sm:%s582] %v599
                %v601 = vld [vmem:[%s591 + $0x20] sm:%s582]
                %602 = vst [vmem:[%s592 + $0x20] sm:%s582] %v601
                %v603 = vld [vmem:[%s591 + $0x28] sm:%s582]
                %604 = vst [vmem:[%s592 + $0x28] sm:%s582] %v603
                %v605 = vld [vmem:[%s591 + $0x30] sm:%s582]
                %606 = vst [vmem:[%s592 + $0x30] sm:%s582] %v605
                %v607 = vld [vmem:[%s591 + $0x38] sm:%s582]
                %608 = vst [vmem:[%s592 + $0x38] sm:%s582] %v607
                %v609 = vld [vmem:[%s591 + $0x40] sm:%s582]
                %610 = vst [vmem:[%s592 + $0x40] sm:%s582] %v609
                %v611 = vld [vmem:[%s591 + $0x48] sm:%s582]
                %612 = vst [vmem:[%s592 + $0x48] sm:%s582] %v611
                %v613 = vld [vmem:[%s591 + $0x50] sm:%s582]
                %614 = vst [vmem:[%s592 + $0x50] sm:%s582] %v613
                %v615 = vld [vmem:[%s591 + $0x58] sm:%s582]
                %616 = vst [vmem:[%s592 + $0x58] sm:%s582] %v615
                %v617 = vld [vmem:[%s591 + $0x60] sm:%s582]
                %618 = vst [vmem:[%s592 + $0x60] sm:%s582] %v617
                %v619 = vld [vmem:[%s591 + $0x68] sm:%s582]
                %620 = vst [vmem:[%s592 + $0x68] sm:%s582] %v619
                %v621 = vld [vmem:[%s591 + $0x70] sm:%s582]
                %622 = vst [vmem:[%s592 + $0x70] sm:%s582] %v621
                %v623 = vld [vmem:[%s591 + $0x78] sm:%s582]
                %624 = vst [vmem:[%s592 + $0x78] sm:%s582] %v623
                %s625 = sadd.s32 1, %s590
                %p626 = scmp.ge.s32.totalorder %s625, %s583
                %s627 = scalar_select %p626, 0, %s625
                %s628 = smul.u32 %s627, 128
                %s629 = smul.u32 %s627, 128
                %s630 = scalar_lea.vmem %s562, %s628 [#allocation2]
                %s631 = scalar_lea.vmem %s573, %s629
              $region61: #{mlp_forward.5} parent=55 // loop_footer
                %s587 = sadd.s32 %s585, 1
              $region62: #{mlp_forward.5} parent=55 // loop_footer_branch
                %584 = sbr.rel target = $region58
              $region63: #{mlp_forward.5} parent=55 // loop_exit
                _
              %s632 = sshrl.u32 %s569, 4
              %s633 = sand.u32 %s569, 15
              %s634 = smul.u32 %s632, 16
              %s635 = smul.u32 8, %s634
              %s636 = scalar_lea.vmem %s562, %s635 [#allocation2]
              %s637 = smul.u32 8, %s634
              %s638 = scalar_lea.vmem %s573, %s637
              // While loop
              $region64: #{mlp_forward.5} parent=55 // loop_pre_header
                _
              $region65: #{mlp_forward.5} parent=55 // loop_header
                %s640 = sphi 0, %s642
                %p641 = scmp.ge.s32.totalorder %s640, %s633
                %s645 = sphi 0, %s652
                %s646 = sphi %s636, %s655
                %s647 = sphi %s638, %s656
              $region66: #{mlp_forward.5} parent=55 // loop_header_branch
                %644 = sbr.rel (%p641) target = $region70
              $region67: #{mlp_forward.5} parent=55 // loop_body
                %v648 = vld [vmem:[%s646] sm:%s582]
                %649 = vst [vmem:[%s647] sm:%s582] %v648
                %s650 = sadd.s32 1, %s645
                %p651 = scmp.ge.s32.totalorder %s650, %s633
                %s652 = scalar_select %p651, 0, %s650
                %s653 = smul.u32 %s652, 8
                %s654 = smul.u32 %s652, 8
                %s655 = scalar_lea.vmem %s636, %s653 [#allocation2]
                %s656 = scalar_lea.vmem %s638, %s654
              $region68: #{mlp_forward.5} parent=55 // loop_footer
                %s642 = sadd.s32 %s640, 1
              $region69: #{mlp_forward.5} parent=55 // loop_footer_branch
                %639 = sbr.rel target = $region65
              $region70: #{mlp_forward.5} parent=55 // loop_exit
                _
            $region56: #{mlp_forward.5} parent=47 // pred_fallthru
              _
          $region48: #{mlp_forward.5} parent=43 // pred_fallthru
            _
          %735 = vnop
        $region44: #{mlp_forward.5} parent=39 // pred_fallthru
          _
      $region40: #{mlp_forward.5} parent=5 // pred_fallthru
        _
      %p736 = scmp.le.s32.totalorder 2, %s11
      // Predicated region
      $region93: #{mlp_forward.5} parent=5 // pred_check
        %p737 = pneg %p736
      $region94: #{mlp_forward.5} parent=5 // pred_check_branch
        %739 = sbr.rel (%p737) target = $region96
      $region95: #{mlp_forward.5} parent=5 // pred_region
        %s740 = ssub.s32 %s11, 2
        // Predicated region
        $region97: #{mlp_forward.5} parent=95 // pred_check
          %p741 = pneg %p150
        $region98: #{mlp_forward.5} parent=95 // pred_check_branch
          %743 = sbr.rel (%p741) target = $region100
        $region99: #{mlp_forward.5} parent=95 // pred_region
          %s744 = sand.u32 %s135, 1
          %s745 = sand.u32 %s135, 1
          %s746 = smul.addr %s745, 128
          %s747 = scalar_lea.vmem [#allocation2], %s746
        $region100: #{mlp_forward.5} parent=95 // pred_fallthru
          _
      $region96: #{mlp_forward.5} parent=5 // pred_fallthru
        _
    $region6: #{mlp_forward.5} parent=1 // loop_footer
      %s15 = sadd.s32 1, %s11
    $region7: #{mlp_forward.5} parent=1 // loop_footer_branch
      %10 = sbr.rel target = $region3
    $region8: #{mlp_forward.5} parent=1 // loop_exit
      _

// kernel: mlp_forward.4
$region0: #{mlp_forward.4}
  #allocation0 [shape = 'u32[]', space=smem, size = 0x4, offset = 0x4, fixed_abs, tag = 'smem constant byte address 0x4 - core index']
  #allocation1 [shape = 'u32[144,128]{1,0:T(1,128)}', space=vmem, size = 0x12000, scoped, tag = 'internal scratch']
  %s0 = inlined_call_operand.vmem [shape: f32[200,32], index: 0, kind: input, shape index: {}]
  %s1 = inlined_call_operand.vmem [shape: f32[1,32], index: 1, kind: input, shape index: {}]
  %s2 = inlined_call_operand.vmem [shape: f32[1,32], index: 2, kind: input, shape index: {}]
  %s3 = inlined_call_operand.vmem [shape: bf16[32,64], index: 3, kind: input, shape index: {}]
  %s4 = inlined_call_operand.vmem [shape: f32[1,64], index: 4, kind: input, shape index: {}]
  %s5 = inlined_call_operand.vmem [shape: bf16[200,64], index: 5, kind: output, shape index: {0}]
  %s6 = inlined_call_operand.vmem [shape: f32[1,64], index: 6, kind: output, shape index: {1}]
  %s7 = inlined_call_operand.vmem [shape: f32[1,64], index: 7, kind: output, shape index: {2}]
  %8 = xla_tuple %s5, %s6, %s7
  %s9 = sld [smem:[#allocation0]]
  $region125: #{mlp_forward.4} parent=0
    _
  %s11 = ssub.s32 1, %s9
  %s12 = scalar_select 0, %s11, %s9
  $region1: #{mlp_forward.4} parent=0
    #allocation2 [shape = 'u8[65536]{0}', space=vmem, size = 0x10000, scoped, tag = 'output window, operand 0']
    loop: start=0, step=1, limit=4
    $region2: #{mlp_forward.4} parent=1 // loop_pre_header
      _
    $region3: #{mlp_forward.4} parent=1 // loop_header
      %s14 = sphi 0, %s18
      %p15 = scmp.ge.s32.totalorder %s14, 4
      %s24 = sphi 0, %s26
      %s27 = sphi 0, %s24
      %s28 = sphi 0, %s27
      %s44 = sphi 0, %s28
      %s48 = sphi 0, %s48
      %s50 = sphi 0, %s48
      %s51 = sphi 0, %s50
      %s65 = sphi 0, %s51
      %s69 = sphi 0, %s69
      %s71 = sphi 0, %s69
      %s72 = sphi 0, %s71
      %s86 = sphi 0, %s72
      %s90 = sphi 0, %s90
      %s92 = sphi 0, %s90
      %s93 = sphi 0, %s92
      %s107 = sphi 0, %s93
      %s111 = sphi 0, %s111
      %s113 = sphi 0, %s111
      %s114 = sphi 0, %s113
      %s128 = sphi 0, %s114
      %s134 = sphi 0, %s136
      %s137 = sphi 0, %s134
      %s138 = sphi 0, %s137
      %s154 = sphi 0, %s138
      %s158 = sphi 0, %s158
      %s160 = sphi 0, %s158
      %s161 = sphi 0, %s160
      %s175 = sphi 0, %s161
      %s179 = sphi 0, %s179
      %s181 = sphi 0, %s179
      %s182 = sphi 0, %s181
      %s196 = sphi 0, %s182
    $region4: #{mlp_forward.4} parent=1 // loop_header_branch
      %17 = sbr.rel (%p15) target = $region8
    $region5: #{mlp_forward.4} parent=1 // loop_body
      %s19 = ssub.s32 %s14, 1
      %s20 = ssub.s32 %s14, 2
      %s21 = sadd.s32 %s14, 1
      %s22 = ssub.s32 %s14, %s21
      %p23 = scmp.eq.s32.totalorder %s22, 0
      %s25 = sadd.s32 %s24, 1
      %s26 = scalar_select %p23, %s24, %s25
      %p29 = pneg %p23
      %p30 = scmp.eq.s32.totalorder %s14, 1
      %p31 = por %p29, %p30
      %p32 = scmp.ne.s32.totalorder %s24, %s27
      %p33 = scmp.eq.s32.totalorder %s14, 0
      %p34 = por %p32, %p33
      %p35 = scmp.ne.s32.totalorder %s24, %s27
      %p36 = scmp.eq.s32.totalorder %s19, 1
      %p37 = por %p35, %p36
      %p38 = scmp.ne.s32.totalorder %s27, %s28
      %p39 = scmp.eq.s32.totalorder %s19, 0
      %p40 = por %p38, %p39
      %p41 = scmp.ne.s32.totalorder %s27, %s28
      %p42 = scmp.eq.s32.totalorder %s20, 1
      %p43 = por %p41, %p42
      %p45 = scmp.ne.s32.totalorder %s28, %s44
      %p46 = scmp.eq.s32.totalorder %s20, 0
      %p47 = por %p45, %p46
      %s49 = sadd.s32 %s48, 1
      %p52 = scmp.eq.s32.totalorder %s14, 1
      %p53 = scmp.ne.s32.totalorder %s48, %s50
      %p54 = scmp.eq.s32.totalorder %s14, 0
      %p55 = por %p53, %p54
      %p56 = scmp.ne.s32.totalorder %s48, %s50
      %p57 = scmp.eq.s32.totalorder %s19, 1
      %p58 = por %p56, %p57
      %p59 = scmp.ne.s32.totalorder %s50, %s51
      %p60 = scmp.eq.s32.totalorder %s19, 0
      %p61 = por %p59, %p60
      %p62 = scmp.ne.s32.totalorder %s50, %s51
      %p63 = scmp.eq.s32.totalorder %s20, 1
      %p64 = por %p62, %p63
      %p66 = scmp.ne.s32.totalorder %s51, %s65
      %p67 = scmp.eq.s32.totalorder %s20, 0
      %p68 = por %p66, %p67
      %s70 = sadd.s32 %s69, 1
      %p73 = scmp.eq.s32.totalorder %s14, 1
      %p74 = scmp.ne.s32.totalorder %s69, %s71
      %p75 = scmp.eq.s32.totalorder %s14, 0
      %p76 = por %p74, %p75
      %p77 = scmp.ne.s32.totalorder %s69, %s71
      %p78 = scmp.eq.s32.totalorder %s19, 1
      %p79 = por %p77, %p78
      %p80 = scmp.ne.s32.totalorder %s71, %s72
      %p81 = scmp.eq.s32.totalorder %s19, 0
      %p82 = por %p80, %p81
      %p83 = scmp.ne.s32.totalorder %s71, %s72
      %p84 = scmp.eq.s32.totalorder %s20, 1
      %p85 = por %p83, %p84
      %p87 = scmp.ne.s32.totalorder %s72, %s86
      %p88 = scmp.eq.s32.totalorder %s20, 0
      %p89 = por %p87, %p88
      %s91 = sadd.s32 %s90, 1
      %p94 = scmp.eq.s32.totalorder %s14, 1
      %p95 = scmp.ne.s32.totalorder %s90, %s92
      %p96 = scmp.eq.s32.totalorder %s14, 0
      %p97 = por %p95, %p96
      %p98 = scmp.ne.s32.totalorder %s90, %s92
      %p99 = scmp.eq.s32.totalorder %s19, 1
      %p100 = por %p98, %p99
      %p101 = scmp.ne.s32.totalorder %s92, %s93
      %p102 = scmp.eq.s32.totalorder %s19, 0
      %p103 = por %p101, %p102
      %p104 = scmp.ne.s32.totalorder %s92, %s93
      %p105 = scmp.eq.s32.totalorder %s20, 1
      %p106 = por %p104, %p105
      %p108 = scmp.ne.s32.totalorder %s93, %s107
      %p109 = scmp.eq.s32.totalorder %s20, 0
      %p110 = por %p108, %p109
      %s112 = sadd.s32 %s111, 1
      %p115 = scmp.eq.s32.totalorder %s14, 1
      %p116 = scmp.ne.s32.totalorder %s111, %s113
      %p117 = scmp.eq.s32.totalorder %s14, 0
      %p118 = por %p116, %p117
      %p119 = scmp.ne.s32.totalorder %s111, %s113
      %p120 = scmp.eq.s32.totalorder %s19, 1
      %p121 = por %p119, %p120
      %p122 = scmp.ne.s32.totalorder %s113, %s114
      %p123 = scmp.eq.s32.totalorder %s19, 0
      %p124 = por %p122, %p123
      %p125 = scmp.ne.s32.totalorder %s113, %s114
      %p126 = scmp.eq.s32.totalorder %s20, 1
      %p127 = por %p125, %p126
      %p129 = scmp.ne.s32.totalorder %s114, %s128
      %p130 = scmp.eq.s32.totalorder %s20, 0
      %p131 = por %p129, %p130
      %s132 = ssub.s32 %s14, %s21
      %p133 = scmp.eq.s32.totalorder %s132, 0
      %s135 = sadd.s32 %s134, 1
      %s136 = scalar_select %p133, %s134, %s135
      %p139 = pneg %p133
      %p140 = scmp.eq.s32.totalorder %s14, 1
      %p141 = por %p139, %p140
      %p142 = scmp.ne.s32.totalorder %s134, %s137
      %p143 = scmp.eq.s32.totalorder %s14, 0
      %p144 = por %p142, %p143
      %p145 = scmp.ne.s32.totalorder %s134, %s137
      %p146 = scmp.eq.s32.totalorder %s19, 1
      %p147 = por %p145, %p146
      %p148 = scmp.ne.s32.totalorder %s137, %s138
      %p149 = scmp.eq.s32.totalorder %s19, 0
      %p150 = por %p148, %p149
      %p151 = scmp.ne.s32.totalorder %s137, %s138
      %p152 = scmp.eq.s32.totalorder %s20, 1
      %p153 = por %p151, %p152
      %p155 = scmp.ne.s32.totalorder %s138, %s154
      %p156 = scmp.eq.s32.totalorder %s20, 0
      %p157 = por %p155, %p156
      %s159 = sadd.s32 %s158, 1
      %p162 = scmp.eq.s32.totalorder %s14, 1
      %p163 = scmp.ne.s32.totalorder %s158, %s160
      %p164 = scmp.eq.s32.totalorder %s14, 0
      %p165 = por %p163, %p164
      %p166 = scmp.ne.s32.totalorder %s158, %s160
      %p167 = scmp.eq.s32.totalorder %s19, 1
      %p168 = por %p166, %p167
      %p169 = scmp.ne.s32.totalorder %s160, %s161
      %p170 = scmp.eq.s32.totalorder %s19, 0
      %p171 = por %p169, %p170
      %p172 = scmp.ne.s32.totalorder %s160, %s161
      %p173 = scmp.eq.s32.totalorder %s20, 1
      %p174 = por %p172, %p173
      %p176 = scmp.ne.s32.totalorder %s161, %s175
      %p177 = scmp.eq.s32.totalorder %s20, 0
      %p178 = por %p176, %p177
      %s180 = sadd.s32 %s179, 1
      %p183 = scmp.eq.s32.totalorder %s14, 1
      %p184 = scmp.ne.s32.totalorder %s179, %s181
      %p185 = scmp.eq.s32.totalorder %s14, 0
      %p186 = por %p184, %p185
      %p187 = scmp.ne.s32.totalorder %s179, %s181
      %p188 = scmp.eq.s32.totalorder %s19, 1
      %p189 = por %p187, %p188
      %p190 = scmp.ne.s32.totalorder %s181, %s182
      %p191 = scmp.eq.s32.totalorder %s19, 0
      %p192 = por %p190, %p191
      %p193 = scmp.ne.s32.totalorder %s181, %s182
      %p194 = scmp.eq.s32.totalorder %s20, 1
      %p195 = por %p193, %p194
      %p197 = scmp.ne.s32.totalorder %s182, %s196
      %p198 = scmp.eq.s32.totalorder %s20, 0
      %p199 = por %p197, %p198
      %p200 = scmp.le.s32.totalorder 1, %s14
      %p201 = scmp.lt.s32.totalorder %s14, 3
      %p202 = pnand %p200, %p201
      %p203 = pneg %p202
      // Predicated region
      $region9: #{mlp_forward.4} parent=5 // pred_check
        _
      $region10: #{mlp_forward.4} parent=5 // pred_check_branch
        %205 = sbr.rel (%p202) target = $region12
      $region11: #{mlp_forward.4} parent=5 // pred_region
        %s206 = ssub.s32 %s14, 1
        // Predicated region
        $region13: #{mlp_forward.4} parent=11 // pred_check
          %p207 = pneg %p61
        $region14: #{mlp_forward.4} parent=11 // pred_check_branch
          %209 = sbr.rel (%p207) target = $region16
        $region15: #{mlp_forward.4} parent=11 // pred_region
          _
        $region16: #{mlp_forward.4} parent=11 // pred_fallthru
          _
        // Predicated region
        $region17: #{mlp_forward.4} parent=11 // pred_check
          %p210 = pneg %p82
        $region18: #{mlp_forward.4} parent=11 // pred_check_branch
          %212 = sbr.rel (%p210) target = $region20
        $region19: #{mlp_forward.4} parent=11 // pred_region
          _
        $region20: #{mlp_forward.4} parent=11 // pred_fallthru
          _
        // Predicated region
        $region21: #{mlp_forward.4} parent=11 // pred_check
          %p213 = pneg %p103
        $region22: #{mlp_forward.4} parent=11 // pred_check_branch
          %215 = sbr.rel (%p213) target = $region24
        $region23: #{mlp_forward.4} parent=11 // pred_region
          _
        $region24: #{mlp_forward.4} parent=11 // pred_fallthru
          _
        // Predicated region
        $region25: #{mlp_forward.4} parent=11 // pred_check
          %p216 = pneg %p124
        $region26: #{mlp_forward.4} parent=11 // pred_check_branch
          %218 = sbr.rel (%p216) target = $region28
        $region27: #{mlp_forward.4} parent=11 // pred_region
          _
        $region28: #{mlp_forward.4} parent=11 // pred_fallthru
          _
      $region12: #{mlp_forward.4} parent=5 // pred_fallthru
        _
      %p219 = scmp.lt.s32.totalorder %s14, 2
      // Predicated region
      $region29: #{mlp_forward.4} parent=5 // pred_check
        %p220 = pneg %p219
      $region30: #{mlp_forward.4} parent=5 // pred_check_branch
        %222 = sbr.rel (%p220) target = $region32
      $region31: #{mlp_forward.4} parent=5 // pred_region
        // Predicated region
        $region33: #{mlp_forward.4} parent=31 // pred_check
          %p223 = pneg %p34
        $region34: #{mlp_forward.4} parent=31 // pred_check_branch
          %225 = sbr.rel (%p223) target = $region36
        $region35: #{mlp_forward.4} parent=31 // pred_region
          %s226 = smul.u32 16, %s14
          %s227 = ssub.s32 25, %s226
          %p228 = scmp.lt.s32.totalorder %s227, 16
          %s229 = scalar_select %p228, %s227, 16
          %s230 = smul.u32 128, %s229
          %p231 = scmp.lt.s32.totalorder %s226, 24
          %s232 = scalar_select %p231, %s226, 24
          %s233 = smul.addr %s232, 8
          %s234 = scalar_lea.vmem %s0, %s233
          %s235 = smul.u32 16, %s14
          %s236 = ssub.s32 25, %s235
          %p237 = scmp.lt.s32.totalorder %s236, 16
          %s238 = scalar_select %p237, %s236, 16
          %s239 = smul.u32 128, %s238
        $region36: #{mlp_forward.4} parent=31 // pred_fallthru
          _
      $region32: #{mlp_forward.4} parent=5 // pred_fallthru
        _
      %p240 = scmp.le.s32.totalorder 1, %s14
      %p241 = scmp.lt.s32.totalorder %s14, 3
      %p242 = pnand %p240, %p241
      %p243 = pneg %p242
      // Predicated region
      $region37: #{mlp_forward.4} parent=5 // pred_check
        _
      $region38: #{mlp_forward.4} parent=5 // pred_check_branch
        %245 = sbr.rel (%p242) target = $region40
      $region39: #{mlp_forward.4} parent=5 // pred_region
        %s246 = ssub.s32 %s14, 1
        %s247 = smul.u32 16, %s19
        %s248 = ssub.s32 25, %s247
        %p249 = scmp.lt.s32.totalorder %s248, 16
        %s250 = scalar_select %p249, %s248, 16
        %s251 = smul.u32 128, %s250
        %p252 = scmp.lt.s32.totalorder %s247, 24
        %s253 = scalar_select %p252, %s247, 24
        %s254 = smul.addr %s253, 8
        %s255 = scalar_lea.vmem %s0, %s254
        %p256 = pneg %p40
        %p257 = pneg %p37
        %p258 = pneg %p61
        %p259 = pneg %p58
        %p260 = pneg %p82
        %p261 = pneg %p79
        %p262 = pneg %p103
        %p263 = pneg %p100
        %p264 = pneg %p124
        %p265 = pneg %p121
        %p266 = pneg %p150
        %p267 = pneg %p147
        %s268 = sand.u32 %s137, 1
        %s269 = sand.u32 %s137, 1
        %s270 = smul.addr %s269, 64
        %s271 = scalar_lea.vmem [#allocation2], %s270
        %p272 = pneg %p171
        %p273 = pneg %p168
        %p274 = pneg %p192
        %p275 = pneg %p189
        %s276 = smul.u32 16, %s19
        %s277 = ssub.s32 25, %s276
        %p278 = scmp.lt.s32.totalorder %s277, 16
        %s279 = scalar_select %p278, %s277, 16
        %s280 = smul.u32 128, %s279
        %p281 = scmp.lt.s32.totalorder %s276, 24
        %s282 = scalar_select %p281, %s276, 24
        %s283 = smul.addr %s282, 8
        %s284 = scalar_lea.vmem %s0, %s283
        %s285 = smul.u32 16, %s19
        %s286 = ssub.s32 25, %s285
        %p287 = scmp.lt.s32.totalorder %s286, 16
        %s288 = scalar_select %p287, %s286, 16
        %s289 = smul.u32 128, %s288
        %s290 = smul.u32 16, %s19
        %s291 = ssub.s32 25, %s290
        %p292 = scmp.lt.s32.totalorder %s291, 16
        %s293 = scalar_select %p292, %s291, 16
        %s294 = smul.u32 64, %s293
        %p296 = scmp.eq.s32.totalorder %s19, 0
        // Predicated region
        $region41: #{mlp_forward.4} parent=39 // pred_check
          %p297 = pneg %p296
        $region42: #{mlp_forward.4} parent=39 // pred_check_branch
          %299 = sbr.rel (%p297) target = $region44
        $region43: #{mlp_forward.4} parent=39 // pred_region
          %vm300 = vcmask 516096
          %301 = vst.msk [vmem:[%s6] sm:$0x1] %vm300, 0.0
          %302 = vst.msk [vmem:[%s7] sm:$0x1] %vm300, 0.0
        $region44: #{mlp_forward.4} parent=39 // pred_fallthru
          _
        %v303 = vld [vmem:[%s284] sm:$0xff]
        %v304 = vld [vmem:[%s284 + $0x8] sm:$0xff]
        %v305 = vld [vmem:[%s284 + $0x10] sm:$0xff]
        %v306 = vld [vmem:[%s284 + $0x18] sm:$0xff]
        %v307 = vld [vmem:[%s284 + $0x20] sm:$0xff]
        %v308 = vld [vmem:[%s284 + $0x28] sm:$0xff]
        %v309 = vld [vmem:[%s284 + $0x30] sm:$0xff]
        %v310 = vld [vmem:[%s284 + $0x38] sm:$0xff]
        %v311 = vld [vmem:[%s284 + $0x40] sm:$0xff]
        %v312 = vld [vmem:[%s284 + $0x48] sm:$0xff]
        %v313 = vld [vmem:[%s284 + $0x50] sm:$0xff]
        %v314 = vld [vmem:[%s284 + $0x58] sm:$0xff]
        %v315 = vld [vmem:[%s284 + $0x60] sm:$0xff]
        %v316 = vld [vmem:[%s284 + $0x68] sm:$0xff]
        %v317 = vld [vmem:[%s284 + $0x70] sm:$0xff]
        %v318 = vld [vmem:[%s284 + $0x78] sm:$0xff]
        %v319 = vld [vmem:[%s1] sm:$0x1]
        %v321 = vlaneseq
        %v322 = vshrl.u32 %v321, 7
        %v323 = vsub.s32 0, %v322
        %v324 = vrot.slane %v319, %v323
        %v326 = vmul.f32 %v303, %v324
        %v327 = vmul.f32 %v304, %v324
        %v328 = vmul.f32 %v305, %v324
        %v329 = vmul.f32 %v306, %v324
        %v330 = vmul.f32 %v307, %v324
        %v331 = vmul.f32 %v308, %v324
        %v332 = vmul.f32 %v309, %v324
        %v333 = vmul.f32 %v310, %v324
        %v334 = vmul.f32 %v311, %v324
        %v335 = vmul.f32 %v312, %v324
        %v336 = vmul.f32 %v313, %v324
        %v337 = vmul.f32 %v314, %v324
        %v338 = vmul.f32 %v315, %v324
        %v339 = vmul.f32 %v316, %v324
        %v340 = vmul.f32 %v317, %v324
        %v341 = vmul.f32 %v318, %v324
        %v342 = vld [vmem:[%s2] sm:$0x1]
        %v344 = vlaneseq
        %v345 = vshrl.u32 %v344, 7
        %v346 = vsub.s32 0, %v345
        %v347 = vrot.slane %v342, %v346
        %v349 = vadd.f32 %v326, %v347
        %v350 = vadd.f32 %v327, %v347
        %v351 = vadd.f32 %v328, %v347
        %v352 = vadd.f32 %v329, %v347
        %v353 = vadd.f32 %v330, %v347
        %v354 = vadd.f32 %v331, %v347
        %v355 = vadd.f32 %v332, %v347
        %v356 = vadd.f32 %v333, %v347
        %v357 = vadd.f32 %v334, %v347
        %v358 = vadd.f32 %v335, %v347
        %v359 = vadd.f32 %v336, %v347
        %v360 = vadd.f32 %v337, %v347
        %v361 = vadd.f32 %v338, %v347
        %v362 = vadd.f32 %v339, %v347
        %v363 = vadd.f32 %v340, %v347
        %v364 = vadd.f32 %v341, %v347
        %vm365 = vcmp.ge.f32.partialorder %v349, 0.0
        %vm366 = vcmp.ge.f32.partialorder %v350, 0.0
        %vm367 = vcmp.ge.f32.partialorder %v351, 0.0
        %vm368 = vcmp.ge.f32.partialorder %v352, 0.0
        %vm369 = vcmp.ge.f32.partialorder %v353, 0.0
        %vm370 = vcmp.ge.f32.partialorder %v354, 0.0
        %vm371 = vcmp.ge.f32.partialorder %v355, 0.0
        %vm372 = vcmp.ge.f32.partialorder %v356, 0.0
        %vm373 = vcmp.ge.f32.partialorder %v357, 0.0
        %vm374 = vcmp.ge.f32.partialorder %v358, 0.0
        %vm375 = vcmp.ge.f32.partialorder %v359, 0.0
        %vm376 = vcmp.ge.f32.partialorder %v360, 0.0
        %vm377 = vcmp.ge.f32.partialorder %v361, 0.0
        %vm378 = vcmp.ge.f32.partialorder %v362, 0.0
        %vm379 = vcmp.ge.f32.partialorder %v363, 0.0
        %vm380 = vcmp.ge.f32.partialorder %v364, 0.0
        %v381 = vmul.f32 %v349, 0.2
        %v382 = vmul.f32 %v350, 0.2
        %v383 = vmul.f32 %v351, 0.2
        %v384 = vmul.f32 %v352, 0.2
        %v385 = vmul.f32 %v353, 0.2
        %v386 = vmul.f32 %v354, 0.2
        %v387 = vmul.f32 %v355, 0.2
        %v388 = vmul.f32 %v356, 0.2
        %v389 = vmul.f32 %v357, 0.2
        %v390 = vmul.f32 %v358, 0.2
        %v391 = vmul.f32 %v359, 0.2
        %v392 = vmul.f32 %v360, 0.2
        %v393 = vmul.f32 %v361, 0.2
        %v394 = vmul.f32 %v362, 0.2
        %v395 = vmul.f32 %v363, 0.2
        %v396 = vmul.f32 %v364, 0.2
        %v397 = vsel %vm365, %v349, %v381
        %v398 = vsel %vm366, %v350, %v382
        %v399 = vsel %vm367, %v351, %v383
        %v400 = vsel %vm368, %v352, %v384
        %v401 = vsel %vm369, %v353, %v385
        %v402 = vsel %vm370, %v354, %v386
        %v403 = vsel %vm371, %v355, %v387
        %v404 = vsel %vm372, %v356, %v388
        %v405 = vsel %vm373, %v357, %v389
        %v406 = vsel %vm374, %v358, %v390
        %v407 = vsel %vm375, %v359, %v391
        %v408 = vsel %vm376, %v360, %v392
        %v409 = vsel %vm377, %v361, %v393
        %v410 = vsel %vm378, %v362, %v394
        %v411 = vsel %vm379, %v363, %v395
        %v412 = vsel %vm380, %v364, %v396
        %v413 = vpack.c.bf16 %v398, %v397
        %v414 = vpack.c.bf16 %v400, %v399
        %v415 = vpack.c.bf16 %v402, %v401
        %v416 = vpack.c.bf16 %v404, %v403
        %v417 = vpack.c.bf16 %v406, %v405
        %v418 = vpack.c.bf16 %v408, %v407
        %v419 = vpack.c.bf16 %v410, %v409
        %v420 = vpack.c.bf16 %v412, %v411
        %v421 = vld [vmem:[%s3] sm:$0xf]
        %v422 = vld [vmem:[%s3 + $0x4] sm:$0xf]
        %v423 = vld [vmem:[%s3 + $0x8] sm:$0xf]
        %v424 = vld [vmem:[%s3 + $0xc] sm:$0xf]
        %v425 = vld [vmem:[%s4] sm:$0x1]
        %v427 = vlaneseq
        %v428 = vshrl.u32 %v427, 7
        %v429 = vsub.s32 0, %v428
        %v430 = vrot.slane %v425, %v429
        %v436 = vunpack.c.l.b16 %v421
        %v437 = vunpack.c.l.b16 %v422
        %v438 = vunpack.c.l.b16 %v423
        %v439 = vunpack.c.l.b16 %v424
        %v440 = vpack.c.b16 %v437, %v436
        %v441 = vpack.c.b16 %v439, %v438
        %vm444 = vcmask 261120
        %v446 = vsel %vm444, %v413, 0
        %v449 = vsel %vm444, %v414, 0
        %v452 = vsel %vm444, %v415, 0
        %v455 = vsel %vm444, %v416, 0
        %v458 = vsel %vm444, %v417, 0
        %v461 = vsel %vm444, %v418, 0
        %v464 = vsel %vm444, %v419, 0
        %v467 = vsel %vm444, %v420, 0
        %469 = vmatprep.subr.bf16.mxu0 0
        %470 = vmatpush1.bf16.msra.mxu0 0
        %471 = vmatprep.subr.bf16.mxu0 0
        %472 = vmatpush1.bf16.msra.mxu0 0
        %473 = vmatprep.subr.bf16.mxu0 0
        %474 = vmatpush1.bf16.msra.mxu0 0
        %475 = vmatprep.subr.bf16.mxu0 0
        %476 = vmatpush1.bf16.msra.mxu0 0
        %477 = vmatprep.subr.bf16.mxu0 0
        %478 = vmatpush1.bf16.msra.mxu0 0
        %479 = vmatprep.subr.bf16.mxu0 0
        %480 = vmatpush1.bf16.msra.mxu0 0
        %481 = vmatprep.subr.bf16.mxu0 0
        %482 = vmatpush1.bf16.msra.mxu0 %v441
        %483 = vmatprep.subr.bf16.mxu0 0
        %484 = vmatpush1.bf16.msra.mxu0 %v440
        %485 = vmatprep.subr.bf16.mxu0 0
        %486 = vmatpush2.bf16.msra.mxu0 0
        %487 = vmatprep.subr.bf16.mxu0 0
        %488 = vmatpush2.bf16.msra.mxu0 0
        %489 = vmatprep.subr.bf16.mxu0 0
        %490 = vmatpush2.bf16.msra.mxu0 0
        %491 = vmatprep.subr.bf16.mxu0 0
        %492 = vmatpush2.bf16.msra.mxu0 0
        %493 = vmatprep.subr.bf16.mxu0 0
        %494 = vmatpush2.bf16.msra.mxu0 0
        %495 = vmatprep.subr.bf16.mxu0 0
        %496 = vmatpush2.bf16.msra.mxu0 0
        %497 = vmatprep.subr.bf16.mxu0 0
        %498 = vmatpush2.bf16.msra.mxu0 0
        %499 = vmatprep.subr.bf16.mxu0 0
        %500 = vmatpush2.bf16.msra.mxu0 0
        %501 = vmatprep.mubr.bf16.mxu0 0
        %502 = vmatmul.mubr.bf16.gmra.mxu0 %v446
        %v503 = vpop.f32.mrf.mxu0
        %v504 = vadd.f32 %v430, %v503
        %v505 = vpop.f32.mrf.mxu0
        %v506 = vpop.f32.mrf.mxu0
        %v507 = vadd.f32 %v430, %v506
        %v508 = vpop.f32.mrf.mxu0
        %509 = vmatprep.mubr.bf16.mxu0 0
        %510 = vmatmul.mubr.bf16.gmra.mxu0 %v449
        %v511 = vpop.f32.mrf.mxu0
        %v512 = vadd.f32 %v430, %v511
        %v513 = vpop.f32.mrf.mxu0
        %v514 = vpop.f32.mrf.mxu0
        %v515 = vadd.f32 %v430, %v514
        %v516 = vpop.f32.mrf.mxu0
        %517 = vmatprep.mubr.bf16.mxu0 0
        %518 = vmatmul.mubr.bf16.gmra.mxu0 %v452
        %v519 = vpop.f32.mrf.mxu0
        %v520 = vadd.f32 %v430, %v519
        %v521 = vpop.f32.mrf.mxu0
        %v522 = vpop.f32.mrf.mxu0
        %v523 = vadd.f32 %v430, %v522
        %v524 = vpop.f32.mrf.mxu0
        %525 = vmatprep.mubr.bf16.mxu0 0
        %526 = vmatmul.mubr.bf16.gmra.mxu0 %v455
        %v527 = vpop.f32.mrf.mxu0
        %v528 = vadd.f32 %v430, %v527
        %v529 = vpop.f32.mrf.mxu0
        %v530 = vpop.f32.mrf.mxu0
        %v531 = vadd.f32 %v430, %v530
        %v532 = vpop.f32.mrf.mxu0
        %533 = vmatprep.mubr.bf16.mxu0 0
        %534 = vmatmul.mubr.bf16.gmra.mxu0 %v458
        %v535 = vpop.f32.mrf.mxu0
        %v536 = vadd.f32 %v430, %v535
        %v537 = vpop.f32.mrf.mxu0
        %v538 = vpop.f32.mrf.mxu0
        %v539 = vadd.f32 %v430, %v538
        %v540 = vpop.f32.mrf.mxu0
        %541 = vmatprep.mubr.bf16.mxu0 0
        %542 = vmatmul.mubr.bf16.gmra.mxu0 %v461
        %v543 = vpop.f32.mrf.mxu0
        %v544 = vadd.f32 %v430, %v543
        %v545 = vpop.f32.mrf.mxu0
        %v546 = vpop.f32.mrf.mxu0
        %v547 = vadd.f32 %v430, %v546
        %v548 = vpop.f32.mrf.mxu0
        %549 = vmatprep.mubr.bf16.mxu0 0
        %550 = vmatmul.mubr.bf16.gmra.mxu0 %v464
        %v551 = vpop.f32.mrf.mxu0
        %v552 = vadd.f32 %v430, %v551
        %v553 = vpop.f32.mrf.mxu0
        %v554 = vpop.f32.mrf.mxu0
        %v555 = vadd.f32 %v430, %v554
        %v556 = vpop.f32.mrf.mxu0
        %557 = vmatprep.mubr.bf16.mxu0 0
        %558 = vmatmul.mubr.bf16.gmra.mxu0 %v467
        %v559 = vpop.f32.mrf.mxu0
        %v560 = vadd.f32 %v430, %v559
        %v561 = vpop.f32.mrf.mxu0
        %v562 = vpop.f32.mrf.mxu0
        %v563 = vadd.f32 %v430, %v562
        %v564 = vpop.f32.mrf.mxu0
        %565 = vdwg.mxu0
        %v566 = vpack.c.bf16 %v507, %v504
        %v567 = vpack.c.bf16 %v515, %v512
        %v568 = vpack.c.bf16 %v523, %v520
        %v569 = vpack.c.bf16 %v531, %v528
        %v570 = vpack.c.bf16 %v539, %v536
        %v571 = vpack.c.bf16 %v547, %v544
        %v572 = vpack.c.bf16 %v555, %v552
        %v573 = vpack.c.bf16 %v563, %v560
        %v582 = vunpack.c.l.b16 %v566
        %v583 = vunpack.c.h.b16 %v566
        %v584 = vunpack.c.l.b16 %v567
        %v585 = vunpack.c.h.b16 %v567
        %v586 = vunpack.c.l.b16 %v568
        %v587 = vunpack.c.h.b16 %v568
        %v588 = vunpack.c.l.b16 %v569
        %v589 = vunpack.c.h.b16 %v569
        %v590 = vunpack.c.l.b16 %v570
        %v591 = vunpack.c.h.b16 %v570
        %v592 = vunpack.c.l.b16 %v571
        %v593 = vunpack.c.h.b16 %v571
        %v594 = vunpack.c.l.b16 %v572
        %v595 = vunpack.c.h.b16 %v572
        %v596 = vunpack.c.l.b16 %v573
        %v597 = vunpack.c.h.b16 %v573
        %v598 = vpack.c.b16 %v582, %v582
        %v599 = vpack.c.b16 %v583, %v583
        %v600 = vpack.c.b16 %v584, %v584
        %v601 = vpack.c.b16 %v585, %v585
        %v602 = vpack.c.b16 %v586, %v586
        %v603 = vpack.c.b16 %v587, %v587
        %v604 = vpack.c.b16 %v588, %v588
        %v605 = vpack.c.b16 %v589, %v589
        %v606 = vpack.c.b16 %v590, %v590
        %v607 = vpack.c.b16 %v591, %v591
        %v608 = vpack.c.b16 %v592, %v592
        %v609 = vpack.c.b16 %v593, %v593
        %v610 = vpack.c.b16 %v594, %v594
        %v611 = vpack.c.b16 %v595, %v595
        %v612 = vpack.c.b16 %v596, %v596
        %v613 = vpack.c.b16 %v597, %v597
        %vm630 = vcmask 519168
        %631 = vst.msk [vmem:[%s271] sm:$0xf] %vm630, %v598
        %632 = vst.msk [vmem:[%s271 + $0x4] sm:$0xf] %vm630, %v599
        %633 = vst.msk [vmem:[%s271 + $0x8] sm:$0xf] %vm630, %v600
        %634 = vst.msk [vmem:[%s271 + $0xc] sm:$0xf] %vm630, %v601
        %635 = vst.msk [vmem:[%s271 + $0x10] sm:$0xf] %vm630, %v602
        %636 = vst.msk [vmem:[%s271 + $0x14] sm:$0xf] %vm630, %v603
        %637 = vst.msk [vmem:[%s271 + $0x18] sm:$0xf] %vm630, %v604
        %638 = vst.msk [vmem:[%s271 + $0x1c] sm:$0xf] %vm630, %v605
        %639 = vst.msk [vmem:[%s271 + $0x20] sm:$0xf] %vm630, %v606
        %640 = vst.msk [vmem:[%s271 + $0x24] sm:$0xf] %vm630, %v607
        %641 = vst.msk [vmem:[%s271 + $0x28] sm:$0xf] %vm630, %v608
        %642 = vst.msk [vmem:[%s271 + $0x2c] sm:$0xf] %vm630, %v609
        %643 = vst.msk [vmem:[%s271 + $0x30] sm:$0xf] %vm630, %v610
        %644 = vst.msk [vmem:[%s271 + $0x34] sm:$0xf] %vm630, %v611
        %645 = vst.msk [vmem:[%s271 + $0x38] sm:$0xf] %vm630, %v612
        %646 = vst.msk [vmem:[%s271 + $0x3c] sm:$0xf] %vm630, %v613
        %p647 = scmp.ne.s32.totalorder %s19, 1
        // Predicated region
        $region45: #{mlp_forward.4} parent=39 // pred_check
          %p648 = pneg %p647
        $region46: #{mlp_forward.4} parent=39 // pred_check_branch
          %650 = sbr.rel (%p648) target = $region48
        $region47: #{mlp_forward.4} parent=39 // pred_region
          %v651 = vld [vmem:[%s6] sm:$0x1]
          %vm652 = vcmask 523264
          %v653 = vsel %vm652, %v504, 0.0
          %v654 = vsel %vm652, %v507, 0.0
          %v655 = vadd.f32 %v653, %v654
          %v656 = vsel %vm652, %v512, 0.0
          %v657 = vadd.f32 %v655, %v656
          %v658 = vsel %vm652, %v515, 0.0
          %v659 = vadd.f32 %v657, %v658
          %v660 = vsel %vm652, %v520, 0.0
          %v661 = vadd.f32 %v659, %v660
          %v662 = vsel %vm652, %v523, 0.0
          %v663 = vadd.f32 %v661, %v662
          %v664 = vsel %vm652, %v528, 0.0
          %v665 = vadd.f32 %v663, %v664
          %v666 = vsel %vm652, %v531, 0.0
          %v667 = vadd.f32 %v665, %v666
          %v668 = vsel %vm652, %v536, 0.0
          %v669 = vadd.f32 %v667, %v668
          %v670 = vsel %vm652, %v539, 0.0
          %v671 = vadd.f32 %v669, %v670
          %v672 = vsel %vm652, %v544, 0.0
          %v673 = vadd.f32 %v671, %v672
          %v674 = vsel %vm652, %v547, 0.0
          %v675 = vadd.f32 %v673, %v674
          %v676 = vsel %vm652, %v552, 0.0
          %v677 = vadd.f32 %v675, %v676
          %v678 = vsel %vm652, %v555, 0.0
          %v679 = vadd.f32 %v677, %v678
          %v680 = vsel %vm652, %v560, 0.0
          %v681 = vadd.f32 %v679, %v680
          %v682 = vsel %vm652, %v563, 0.0
          %v683 = vadd.f32 %v681, %v682
          %v684 = vrot.slane %v683, 4
          %v685 = vadd.f32 %v683, %v684
          %v686 = vrot.slane %v685, 2
          %v687 = vadd.f32 %v685, %v686
          %v688 = vrot.slane %v687, 1
          %v689 = vadd.f32 %v687, %v688
          %v690 = vadd.f32 %v651, %v689
          %vm691 = vcmask 516096
          %692 = vst.msk [vmem:[%s6] sm:$0x1] %vm691, %v690
          %v693 = vld [vmem:[%s7] sm:$0x1]
          %v694 = vmul.f32 %v504, %v504
          %v695 = vmul.f32 %v507, %v507
          %v696 = vmul.f32 %v512, %v512
          %v697 = vmul.f32 %v515, %v515
          %v698 = vmul.f32 %v520, %v520
          %v699 = vmul.f32 %v523, %v523
          %v700 = vmul.f32 %v528, %v528
          %v701 = vmul.f32 %v531, %v531
          %v702 = vmul.f32 %v536, %v536
          %v703 = vmul.f32 %v539, %v539
          %v704 = vmul.f32 %v544, %v544
          %v705 = vmul.f32 %v547, %v547
          %v706 = vmul.f32 %v552, %v552
          %v707 = vmul.f32 %v555, %v555
          %v708 = vmul.f32 %v560, %v560
          %v709 = vmul.f32 %v563, %v563
          %v710 = vsel %vm652, %v694, 0.0
          %v711 = vsel %vm652, %v695, 0.0
          %v712 = vadd.f32 %v710, %v711
          %v713 = vsel %vm652, %v696, 0.0
          %v714 = vadd.f32 %v712, %v713
          %v715 = vsel %vm652, %v697, 0.0
          %v716 = vadd.f32 %v714, %v715
          %v717 = vsel %vm652, %v698, 0.0
          %v718 = vadd.f32 %v716, %v717
          %v719 = vsel %vm652, %v699, 0.0
          %v720 = vadd.f32 %v718, %v719
          %v721 = vsel %vm652, %v700, 0.0
          %v722 = vadd.f32 %v720, %v721
          %v723 = vsel %vm652, %v701, 0.0
          %v724 = vadd.f32 %v722, %v723
          %v725 = vsel %vm652, %v702, 0.0
          %v726 = vadd.f32 %v724, %v725
          %v727 = vsel %vm652, %v703, 0.0
          %v728 = vadd.f32 %v726, %v727
          %v729 = vsel %vm652, %v704, 0.0
          %v730 = vadd.f32 %v728, %v729
          %v731 = vsel %vm652, %v705, 0.0
          %v732 = vadd.f32 %v730, %v731
          %v733 = vsel %vm652, %v706, 0.0
          %v734 = vadd.f32 %v732, %v733
          %v735 = vsel %vm652, %v707, 0.0
          %v736 = vadd.f32 %v734, %v735
          %v737 = vsel %vm652, %v708, 0.0
          %v738 = vadd.f32 %v736, %v737
          %v739 = vsel %vm652, %v709, 0.0
          %v740 = vadd.f32 %v738, %v739
          %v741 = vrot.slane %v740, 4
          %v742 = vadd.f32 %v740, %v741
          %v743 = vrot.slane %v742, 2
          %v744 = vadd.f32 %v742, %v743
          %v745 = vrot.slane %v744, 1
          %v746 = vadd.f32 %v744, %v745
          %v747 = vadd.f32 %v693, %v746
          %748 = vst.msk [vmem:[%s7] sm:$0x1] %vm691, %v747
        $region48: #{mlp_forward.4} parent=39 // pred_fallthru
          _
        %p749 = scmp.eq.s32.totalorder %s19, 1
        // Predicated region
        $region49: #{mlp_forward.4} parent=39 // pred_check
          %p750 = pneg %p749
        $region50: #{mlp_forward.4} parent=39 // pred_check_branch
          %752 = sbr.rel (%p750) target = $region52
        $region51: #{mlp_forward.4} parent=39 // pred_region
          %v753 = vlaneseq
          %v754 = vshrl.u32 %v753, 7
          %v755 = vadd.s32 %v754, 8
          %v756 = vadd.s32 %v754, 16
          %v757 = vadd.s32 %v754, 24
          %v758 = vadd.s32 %v754, 32
          %v759 = vadd.s32 %v754, 40
          %v760 = vadd.s32 %v754, 48
          %v761 = vadd.s32 %v754, 56
          %v762 = vadd.s32 %v754, 64
          %v763 = vadd.s32 %v754, 72
          %v764 = vadd.s32 %v754, 80
          %v765 = vadd.s32 %v754, 88
          %v766 = vadd.s32 %v754, 96
          %v767 = vadd.s32 %v754, 104
          %v768 = vadd.s32 %v754, 112
          %v769 = vadd.s32 %v754, 120
          %s770 = smul.u32 %s19, 128
          %s771 = ssub.s32 200, %s770
          %v772 = vstv %s771
          %vm773 = vcmp.lt.s32.totalorder %v754, %v772
          %vm774 = vcmp.lt.s32.totalorder %v755, %v772
          %vm775 = vcmp.lt.s32.totalorder %v756, %v772
          %vm776 = vcmp.lt.s32.totalorder %v757, %v772
          %vm777 = vcmp.lt.s32.totalorder %v758, %v772
          %vm778 = vcmp.lt.s32.totalorder %v759, %v772
          %vm779 = vcmp.lt.s32.totalorder %v760, %v772
          %vm780 = vcmp.lt.s32.totalorder %v761, %v772
          %vm781 = vcmp.lt.s32.totalorder %v762, %v772
          %vm782 = vcmp.lt.s32.totalorder %v763, %v772
          %vm783 = vcmp.lt.s32.totalorder %v764, %v772
          %vm784 = vcmp.lt.s32.totalorder %v765, %v772
          %vm785 = vcmp.lt.s32.totalorder %v766, %v772
          %vm786 = vcmp.lt.s32.totalorder %v767, %v772
          %vm787 = vcmp.lt.s32.totalorder %v768, %v772
          %vm788 = vcmp.lt.s32.totalorder %v769, %v772
          %v789 = vsel %vm773, %v504, 0.0
          %v790 = vsel %vm774, %v507, 0.0
          %v791 = vsel %vm775, %v512, 0.0
          %v792 = vsel %vm776, %v515, 0.0
          %v793 = vsel %vm777, %v520, 0.0
          %v794 = vsel %vm778, %v523, 0.0
          %v795 = vsel %vm779, %v528, 0.0
          %v796 = vsel %vm780, %v531, 0.0
          %v797 = vsel %vm781, %v536, 0.0
          %v798 = vsel %vm782, %v539, 0.0
          %v799 = vsel %vm783, %v544, 0.0
          %v800 = vsel %vm784, %v547, 0.0
          %v801 = vsel %vm785, %v552, 0.0
          %v802 = vsel %vm786, %v555, 0.0
          %v803 = vsel %vm787, %v560, 0.0
          %v804 = vsel %vm788, %v563, 0.0
          %v805 = vld [vmem:[%s6] sm:$0x1]
          %vm806 = vcmask 523264
          %v807 = vsel %vm806, %v789, 0.0
          %v808 = vsel %vm806, %v790, 0.0
          %v809 = vadd.f32 %v807, %v808
          %v810 = vsel %vm806, %v791, 0.0
          %v811 = vadd.f32 %v809, %v810
          %v812 = vsel %vm806, %v792, 0.0
          %v813 = vadd.f32 %v811, %v812
          %v814 = vsel %vm806, %v793, 0.0
          %v815 = vadd.f32 %v813, %v814
          %v816 = vsel %vm806, %v794, 0.0
          %v817 = vadd.f32 %v815, %v816
          %v818 = vsel %vm806, %v795, 0.0
          %v819 = vadd.f32 %v817, %v818
          %v820 = vsel %vm806, %v796, 0.0
          %v821 = vadd.f32 %v819, %v820
          %v822 = vsel %vm806, %v797, 0.0
          %v823 = vadd.f32 %v821, %v822
          %v824 = vsel %vm806, %v798, 0.0
          %v825 = vadd.f32 %v823, %v824
          %v826 = vsel %vm806, %v799, 0.0
          %v827 = vadd.f32 %v825, %v826
          %v828 = vsel %vm806, %v800, 0.0
          %v829 = vadd.f32 %v827, %v828
          %v830 = vsel %vm806, %v801, 0.0
          %v831 = vadd.f32 %v829, %v830
          %v832 = vsel %vm806, %v802, 0.0
          %v833 = vadd.f32 %v831, %v832
          %v834 = vsel %vm806, %v803, 0.0
          %v835 = vadd.f32 %v833, %v834
          %v836 = vsel %vm806, %v804, 0.0
          %v837 = vadd.f32 %v835, %v836
          %v838 = vrot.slane %v837, 4
          %v839 = vadd.f32 %v837, %v838
          %v840 = vrot.slane %v839, 2
          %v841 = vadd.f32 %v839, %v840
          %v842 = vrot.slane %v841, 1
          %v843 = vadd.f32 %v841, %v842
          %v844 = vadd.f32 %v805, %v843
          %vm845 = vcmask 516096
          %846 = vst.msk [vmem:[%s6] sm:$0x1] %vm845, %v844
          %v847 = vld [vmem:[%s7] sm:$0x1]
          %v848 = vmul.f32 %v789, %v789
          %v849 = vmul.f32 %v790, %v790
          %v850 = vmul.f32 %v791, %v791
          %v851 = vmul.f32 %v792, %v792
          %v852 = vmul.f32 %v793, %v793
          %v853 = vmul.f32 %v794, %v794
          %v854 = vmul.f32 %v795, %v795
          %v855 = vmul.f32 %v796, %v796
          %v856 = vmul.f32 %v797, %v797
          %v857 = vmul.f32 %v798, %v798
          %v858 = vmul.f32 %v799, %v799
          %v859 = vmul.f32 %v800, %v800
          %v860 = vmul.f32 %v801, %v801
          %v861 = vmul.f32 %v802, %v802
          %v862 = vmul.f32 %v803, %v803
          %v863 = vmul.f32 %v804, %v804
          %v864 = vsel %vm806, %v848, 0.0
          %v865 = vsel %vm806, %v849, 0.0
          %v866 = vadd.f32 %v864, %v865
          %v867 = vsel %vm806, %v850, 0.0
          %v868 = vadd.f32 %v866, %v867
          %v869 = vsel %vm806, %v851, 0.0
          %v870 = vadd.f32 %v868, %v869
          %v871 = vsel %vm806, %v852, 0.0
          %v872 = vadd.f32 %v870, %v871
          %v873 = vsel %vm806, %v853, 0.0
          %v874 = vadd.f32 %v872, %v873
          %v875 = vsel %vm806, %v854, 0.0
          %v876 = vadd.f32 %v874, %v875
          %v877 = vsel %vm806, %v855, 0.0
          %v878 = vadd.f32 %v876, %v877
          %v879 = vsel %vm806, %v856, 0.0
          %v880 = vadd.f32 %v878, %v879
          %v881 = vsel %vm806, %v857, 0.0
          %v882 = vadd.f32 %v880, %v881
          %v883 = vsel %vm806, %v858, 0.0
          %v884 = vadd.f32 %v882, %v883
          %v885 = vsel %vm806, %v859, 0.0
          %v886 = vadd.f32 %v884, %v885
          %v887 = vsel %vm806, %v860, 0.0
          %v888 = vadd.f32 %v886, %v887
          %v889 = vsel %vm806, %v861, 0.0
          %v890 = vadd.f32 %v888, %v889
          %v891 = vsel %vm806, %v862, 0.0
          %v892 = vadd.f32 %v890, %v891
          %v893 = vsel %vm806, %v863, 0.0
          %v894 = vadd.f32 %v892, %v893
          %v895 = vrot.slane %v894, 4
          %v896 = vadd.f32 %v894, %v895
          %v897 = vrot.slane %v896, 2
          %v898 = vadd.f32 %v896, %v897
          %v899 = vrot.slane %v898, 1
          %v900 = vadd.f32 %v898, %v899
          %v901 = vadd.f32 %v847, %v900
          %902 = vst.msk [vmem:[%s7] sm:$0x1] %vm845, %v901
        $region52: #{mlp_forward.4} parent=39 // pred_fallthru
          _
        %s903 = sand.u32 %s137, 1
        %s904 = sand.u32 %s137, 1
        %s905 = smul.addr %s904, 64
        %s906 = scalar_lea.vmem [#allocation2], %s905
        // Predicated region
        $region53: #{mlp_forward.4} parent=39 // pred_check
          %p907 = pneg %p147
        $region54: #{mlp_forward.4} parent=39 // pred_check_branch
          %909 = sbr.rel (%p907) target = $region56
        $region55: #{mlp_forward.4} parent=39 // pred_region
          %s910 = smul.u32 16, %s19
          %s911 = ssub.s32 25, %s910
          %p912 = scmp.lt.s32.totalorder %s911, 16
          %s913 = scalar_select %p912, %s911, 16
          %s914 = smul.u32 64, %s913
          %p915 = scmp.ne.s32.totalorder 0, %s914
          %s916 = smul.addr %s910, 4
          %s917 = scalar_lea.vmem %s5, %s916
          // Predicated region
          $region57: #{mlp_forward.4} parent=55 // pred_check
            %p918 = pneg %p915
          $region58: #{mlp_forward.4} parent=55 // pred_check_branch
            %920 = sbr.rel (%p918) target = $region60
          $region59: #{mlp_forward.4} parent=55 // pred_region
            // Predicated region
            $region61: #{mlp_forward.4} parent=59 // pred_check
              _
            $region62: #{mlp_forward.4} parent=59 // pred_check_branch
              %922 = sbr.rel target = $region64
            $region63: #{mlp_forward.4} parent=59 // pred_region
              // Predicated region
              $region83: #{mlp_forward.4} parent=63 // pred_check
                _
              $region84: #{mlp_forward.4} parent=63 // pred_check_branch
                %1002 = sbr.rel (0) target = $region86
              $region85: #{mlp_forward.4} parent=63 // pred_region
                %s1004 = ssub.s32 16, 1
                %s1005 = sshrl.u32 %s913, 4
                // While loop
                $region87: #{mlp_forward.4} parent=85 // loop_pre_header
                  _
                $region88: #{mlp_forward.4} parent=85 // loop_header
                  %s1007 = sphi 0, %s1009
                  %p1008 = scmp.ge.s32.totalorder %s1007, %s1005
                  %s1012 = sphi 0, %s1049
                  %s1013 = sphi %s906, %s1052
                  %s1014 = sphi %s917, %s1053
                $region89: #{mlp_forward.4} parent=85 // loop_header_branch
                  %1011 = sbr.rel (%p1008) target = $region93
                $region90: #{mlp_forward.4} parent=85 // loop_body
                  %v1015 = vld [vmem:[%s1013] sm:%s1004]
                  %1016 = vst [vmem:[%s1014] sm:%s1004] %v1015
                  %v1017 = vld [vmem:[%s1013 + $0x4] sm:%s1004]
                  %1018 = vst [vmem:[%s1014 + $0x4] sm:%s1004] %v1017
                  %v1019 = vld [vmem:[%s1013 + $0x8] sm:%s1004]
                  %1020 = vst [vmem:[%s1014 + $0x8] sm:%s1004] %v1019
                  %v1021 = vld [vmem:[%s1013 + $0xc] sm:%s1004]
                  %1022 = vst [vmem:[%s1014 + $0xc] sm:%s1004] %v1021
                  %v1023 = vld [vmem:[%s1013 + $0x10] sm:%s1004]
                  %1024 = vst [vmem:[%s1014 + $0x10] sm:%s1004] %v1023
                  %v1025 = vld [vmem:[%s1013 + $0x14] sm:%s1004]
                  %1026 = vst [vmem:[%s1014 + $0x14] sm:%s1004] %v1025
                  %v1027 = vld [vmem:[%s1013 + $0x18] sm:%s1004]
                  %1028 = vst [vmem:[%s1014 + $0x18] sm:%s1004] %v1027
                  %v1029 = vld [vmem:[%s1013 + $0x1c] sm:%s1004]
                  %1030 = vst [vmem:[%s1014 + $0x1c] sm:%s1004] %v1029
                  %v1031 = vld [vmem:[%s1013 + $0x20] sm:%s1004]
                  %1032 = vst [vmem:[%s1014 + $0x20] sm:%s1004] %v1031
                  %v1033 = vld [vmem:[%s1013 + $0x24] sm:%s1004]
                  %1034 = vst [vmem:[%s1014 + $0x24] sm:%s1004] %v1033
                  %v1035 = vld [vmem:[%s1013 + $0x28] sm:%s1004]
                  %1036 = vst [vmem:[%s1014 + $0x28] sm:%s1004] %v1035
                  %v1037 = vld [vmem:[%s1013 + $0x2c] sm:%s1004]
                  %1038 = vst [vmem:[%s1014 + $0x2c] sm:%s1004] %v1037
                  %v1039 = vld [vmem:[%s1013 + $0x30] sm:%s1004]
                  %1040 = vst [vmem:[%s1014 + $0x30] sm:%s1004] %v1039
                  %v1041 = vld [vmem:[%s1013 + $0x34] sm:%s1004]
                  %1042 = vst [vmem:[%s1014 + $0x34] sm:%s1004] %v1041
                  %v1043 = vld [vmem:[%s1013 + $0x38] sm:%s1004]
                  %1044 = vst [vmem:[%s1014 + $0x38] sm:%s1004] %v1043
                  %v1045 = vld [vmem:[%s1013 + $0x3c] sm:%s1004]
                  %1046 = vst [vmem:[%s1014 + $0x3c] sm:%s1004] %v1045
                  %s1047 = sadd.s32 1, %s1012
                  %p1048 = scmp.ge.s32.totalorder %s1047, %s1005
                  %s1049 = scalar_select %p1048, 0, %s1047
                  %s1050 = smul.u32 %s1049, 64
                  %s1051 = smul.u32 %s1049, 64
                  %s1052 = scalar_lea.vmem %s906, %s1050 [#allocation2]
                  %s1053 = scalar_lea.vmem %s917, %s1051
                $region91: #{mlp_forward.4} parent=85 // loop_footer
                  %s1009 = sadd.s32 %s1007, 1
                $region92: #{mlp_forward.4} parent=85 // loop_footer_branch
                  %1006 = sbr.rel target = $region88
                $region93: #{mlp_forward.4} parent=85 // loop_exit
                  _
                %s1054 = sshrl.u32 %s913, 4
                %s1055 = sand.u32 %s913, 15
                %s1056 = smul.u32 %s1054, 16
                %s1057 = smul.u32 4, %s1056
                %s1058 = scalar_lea.vmem %s906, %s1057 [#allocation2]
                %s1059 = smul.u32 4, %s1056
                %s1060 = scalar_lea.vmem %s917, %s1059
                // While loop
                $region94: #{mlp_forward.4} parent=85 // loop_pre_header
                  _
                $region95: #{mlp_forward.4} parent=85 // loop_header
                  %s1062 = sphi 0, %s1064
                  %p1063 = scmp.ge.s32.totalorder %s1062, %s1055
                  %s1067 = sphi 0, %s1074
                  %s1068 = sphi %s1058, %s1077
                  %s1069 = sphi %s1060, %s1078
                $region96: #{mlp_forward.4} parent=85 // loop_header_branch
                  %1066 = sbr.rel (%p1063) target = $region100
                $region97: #{mlp_forward.4} parent=85 // loop_body
                  %v1070 = vld [vmem:[%s1068] sm:%s1004]
                  %1071 = vst [vmem:[%s1069] sm:%s1004] %v1070
                  %s1072 = sadd.s32 1, %s1067
                  %p1073 = scmp.ge.s32.totalorder %s1072, %s1055
                  %s1074 = scalar_select %p1073, 0, %s1072
                  %s1075 = smul.u32 %s1074, 4
                  %s1076 = smul.u32 %s1074, 4
                  %s1077 = scalar_lea.vmem %s1058, %s1075 [#allocation2]
                  %s1078 = scalar_lea.vmem %s1060, %s1076
                $region98: #{mlp_forward.4} parent=85 // loop_footer
                  %s1064 = sadd.s32 %s1062, 1
                $region99: #{mlp_forward.4} parent=85 // loop_footer_branch
                  %1061 = sbr.rel target = $region95
                $region100: #{mlp_forward.4} parent=85 // loop_exit
                  _
              $region86: #{mlp_forward.4} parent=63 // pred_fallthru
                _
            $region64: #{mlp_forward.4} parent=59 // pred_fallthru
              _
            // Predicated region
            $region65: #{mlp_forward.4} parent=59 // pred_check
              _
            $region66: #{mlp_forward.4} parent=59 // pred_check_branch
              %924 = sbr.rel (0) target = $region68
            $region67: #{mlp_forward.4} parent=59 // pred_region
              %s926 = ssub.s32 16, 1
              %s927 = sshrl.u32 %s913, 4
              // While loop
              $region69: #{mlp_forward.4} parent=67 // loop_pre_header
                _
              $region70: #{mlp_forward.4} parent=67 // loop_header
                %s929 = sphi 0, %s931
                %p930 = scmp.ge.s32.totalorder %s929, %s927
                %s934 = sphi 0, %s971
                %s935 = sphi %s906, %s974
                %s936 = sphi %s917, %s975
              $region71: #{mlp_forward.4} parent=67 // loop_header_branch
                %933 = sbr.rel (%p930) target = $region75
              $region72: #{mlp_forward.4} parent=67 // loop_body
                %v937 = vld [vmem:[%s935] sm:%s926]
                %938 = vst [vmem:[%s936] sm:%s926] %v937
                %v939 = vld [vmem:[%s935 + $0x4] sm:%s926]
                %940 = vst [vmem:[%s936 + $0x4] sm:%s926] %v939
                %v941 = vld [vmem:[%s935 + $0x8] sm:%s926]
                %942 = vst [vmem:[%s936 + $0x8] sm:%s926] %v941
                %v943 = vld [vmem:[%s935 + $0xc] sm:%s926]
                %944 = vst [vmem:[%s936 + $0xc] sm:%s926] %v943
                %v945 = vld [vmem:[%s935 + $0x10] sm:%s926]
                %946 = vst [vmem:[%s936 + $0x10] sm:%s926] %v945
                %v947 = vld [vmem:[%s935 + $0x14] sm:%s926]
                %948 = vst [vmem:[%s936 + $0x14] sm:%s926] %v947
                %v949 = vld [vmem:[%s935 + $0x18] sm:%s926]
                %950 = vst [vmem:[%s936 + $0x18] sm:%s926] %v949
                %v951 = vld [vmem:[%s935 + $0x1c] sm:%s926]
                %952 = vst [vmem:[%s936 + $0x1c] sm:%s926] %v951
                %v953 = vld [vmem:[%s935 + $0x20] sm:%s926]
                %954 = vst [vmem:[%s936 + $0x20] sm:%s926] %v953
                %v955 = vld [vmem:[%s935 + $0x24] sm:%s926]
                %956 = vst [vmem:[%s936 + $0x24] sm:%s926] %v955
                %v957 = vld [vmem:[%s935 + $0x28] sm:%s926]
                %958 = vst [vmem:[%s936 + $0x28] sm:%s926] %v957
                %v959 = vld [vmem:[%s935 + $0x2c] sm:%s926]
                %960 = vst [vmem:[%s936 + $0x2c] sm:%s926] %v959
                %v961 = vld [vmem:[%s935 + $0x30] sm:%s926]
                %962 = vst [vmem:[%s936 + $0x30] sm:%s926] %v961
                %v963 = vld [vmem:[%s935 + $0x34] sm:%s926]
                %964 = vst [vmem:[%s936 + $0x34] sm:%s926] %v963
                %v965 = vld [vmem:[%s935 + $0x38] sm:%s926]
                %966 = vst [vmem:[%s936 + $0x38] sm:%s926] %v965
                %v967 = vld [vmem:[%s935 + $0x3c] sm:%s926]
                %968 = vst [vmem:[%s936 + $0x3c] sm:%s926] %v967
                %s969 = sadd.s32 1, %s934
                %p970 = scmp.ge.s32.totalorder %s969, %s927
                %s971 = scalar_select %p970, 0, %s969
                %s972 = smul.u32 %s971, 64
                %s973 = smul.u32 %s971, 64
                %s974 = scalar_lea.vmem %s906, %s972 [#allocation2]
                %s975 = scalar_lea.vmem %s917, %s973
              $region73: #{mlp_forward.4} parent=67 // loop_footer
                %s931 = sadd.s32 %s929, 1
              $region74: #{mlp_forward.4} parent=67 // loop_footer_branch
                %928 = sbr.rel target = $region70
              $region75: #{mlp_forward.4} parent=67 // loop_exit
                _
              %s976 = sshrl.u32 %s913, 4
              %s977 = sand.u32 %s913, 15
              %s978 = smul.u32 %s976, 16
              %s979 = smul.u32 4, %s978
              %s980 = scalar_lea.vmem %s906, %s979 [#allocation2]
              %s981 = smul.u32 4, %s978
              %s982 = scalar_lea.vmem %s917, %s981
              // While loop
              $region76: #{mlp_forward.4} parent=67 // loop_pre_header
                _
              $region77: #{mlp_forward.4} parent=67 // loop_header
                %s984 = sphi 0, %s986
                %p985 = scmp.ge.s32.totalorder %s984, %s977
                %s989 = sphi 0, %s996
                %s990 = sphi %s980, %s999
                %s991 = sphi %s982, %s1000
              $region78: #{mlp_forward.4} parent=67 // loop_header_branch
                %988 = sbr.rel (%p985) target = $region82
              $region79: #{mlp_forward.4} parent=67 // loop_body
                %v992 = vld [vmem:[%s990] sm:%s926]
                %993 = vst [vmem:[%s991] sm:%s926] %v992
                %s994 = sadd.s32 1, %s989
                %p995 = scmp.ge.s32.totalorder %s994, %s977
                %s996 = scalar_select %p995, 0, %s994
                %s997 = smul.u32 %s996, 4
                %s998 = smul.u32 %s996, 4
                %s999 = scalar_lea.vmem %s980, %s997 [#allocation2]
                %s1000 = scalar_lea.vmem %s982, %s998
              $region80: #{mlp_forward.4} parent=67 // loop_footer
                %s986 = sadd.s32 %s984, 1
              $region81: #{mlp_forward.4} parent=67 // loop_footer_branch
                %983 = sbr.rel target = $region77
              $region82: #{mlp_forward.4} parent=67 // loop_exit
                _
            $region68: #{mlp_forward.4} parent=59 // pred_fallthru
              _
          $region60: #{mlp_forward.4} parent=55 // pred_fallthru
            _
          %1079 = vnop
        $region56: #{mlp_forward.4} parent=39 // pred_fallthru
          _
        // Predicated region
        $region101: #{mlp_forward.4} parent=39 // pred_check
          %p1080 = pneg %p168
        $region102: #{mlp_forward.4} parent=39 // pred_check_branch
          %1082 = sbr.rel (%p1080) target = $region104
        $region103: #{mlp_forward.4} parent=39 // pred_region
          _
        $region104: #{mlp_forward.4} parent=39 // pred_fallthru
          _
        // Predicated region
        $region105: #{mlp_forward.4} parent=39 // pred_check
          %p1083 = pneg %p189
        $region106: #{mlp_forward.4} parent=39 // pred_check_branch
          %1085 = sbr.rel (%p1083) target = $region108
        $region107: #{mlp_forward.4} parent=39 // pred_region
          _
        $region108: #{mlp_forward.4} parent=39 // pred_fallthru
          _
        // Predicated region
        $region109: #{mlp_forward.4} parent=39 // pred_check
          %p1086 = pneg %p168
        $region110: #{mlp_forward.4} parent=39 // pred_check_branch
          %1088 = sbr.rel (%p1086) target = $region112
        $region111: #{mlp_forward.4} parent=39 // pred_region
          _
        $region112: #{mlp_forward.4} parent=39 // pred_fallthru
          _
        // Predicated region
        $region113: #{mlp_forward.4} parent=39 // pred_check
          %p1089 = pneg %p189
        $region114: #{mlp_forward.4} parent=39 // pred_check_branch
          %1091 = sbr.rel (%p1089) target = $region116
        $region115: #{mlp_forward.4} parent=39 // pred_region
          _
        $region116: #{mlp_forward.4} parent=39 // pred_fallthru
          _
      $region40: #{mlp_forward.4} parent=5 // pred_fallthru
        _
      %p1092 = scmp.le.s32.totalorder 2, %s14
      // Predicated region
      $region117: #{mlp_forward.4} parent=5 // pred_check
        %p1093 = pneg %p1092
      $region118: #{mlp_forward.4} parent=5 // pred_check_branch
        %1095 = sbr.rel (%p1093) target = $region120
      $region119: #{mlp_forward.4} parent=5 // pred_region
        %s1096 = ssub.s32 %s14, 2
        // Predicated region
        $region121: #{mlp_forward.4} parent=119 // pred_check
          %p1097 = pneg %p153
        $region122: #{mlp_forward.4} parent=119 // pred_check_branch
          %1099 = sbr.rel (%p1097) target = $region124
        $region123: #{mlp_forward.4} parent=119 // pred_region
          %s1100 = sand.u32 %s138, 1
          %s1101 = sand.u32 %s138, 1
          %s1102 = smul.addr %s1101, 64
          %s1103 = scalar_lea.vmem [#allocation2], %s1102
        $region124: #{mlp_forward.4} parent=119 // pred_fallthru
          _
      $region120: #{mlp_forward.4} parent=5 // pred_fallthru
        _
    $region6: #{mlp_forward.4} parent=1 // loop_footer
      %s18 = sadd.s32 1, %s14
    $region7: #{mlp_forward.4} parent=1 // loop_footer_branch
      %13 = sbr.rel target = $region3
    $region8: #{mlp_forward.4} parent=1 // loop_exit
      _

</llo_original>
